<compile_context>
chip_gen: v7x
topology: tpu7x:2x2x1
jax: 0.10.0
libtpu: 0.0.40
codegen_flags: <defaults>
</compile_context>

<pallas_src>
import math
import functools

import jax
import jax.numpy as jnp
from jax.experimental import pallas as pl
from jax.experimental.pallas import tpu as pltpu


# ----------------------------------------------------------------------------
# Single fused kernel: all layers + output head
# ----------------------------------------------------------------------------

def _fwd_kernel(x_ref, cos_ref, sina_ref, sinb_ref, mask_ref,
                nw1_ref, wqkv_ref, wo_ref, nw2_ref, w13_ref, w2_ref,
                onw_ref, weff_ref,
                logits_ref,
                resid_ref, attn_ref,
                *, n_heads, eps, scale):
    layer = pl.program_id(0)
    n_layers = pl.num_programs(0)

    BS, D = resid_ref.shape
    Dh = D // n_heads
    Dh2 = Dh // 2
    Hf = w2_ref.shape[1]
    W2D = 2 * D

    @pl.when(layer == 0)
    def _():
        resid_ref[...] = x_ref[...]            # load embeddings once into VMEM

    x = resid_ref[...]                         # (BS, D) f32 residual stream

    # ---- RMSNorm 1 ----
    ms = jnp.mean(x * x, axis=-1, keepdims=True)
    h = x * jax.lax.rsqrt(ms + eps) * nw1_ref[0]                 # (BS, D)

    # ---- packed QKV projection: one bf16 MXU pass, f32 accumulate ----
    qkv = jnp.dot(h.astype(jnp.bfloat16), wqkv_ref[0],
                  preferred_element_type=jnp.float32)            # (BS, 3D)

    # ---- RoPE on the joint Q|K slab (BS, 2D), whole-width ----
    # per-head halves layout: rot = qk*COS + pull_right(qk,Dh2)*SIN_A
    #                                      + pull_left (qk,Dh2)*SIN_B
    qk = qkv[:, :W2D]
    pull_right = jnp.concatenate([qk[:, Dh2:], qk[:, :Dh2]], axis=-1)
    pull_left = jnp.concatenate([qk[:, W2D - Dh2:], qk[:, :W2D - Dh2]], axis=-1)
    qk_rot = qk * cos_ref[...] + pull_right * sina_ref[...] + pull_left * sinb_ref[...]

    qk_b = qk_rot.astype(jnp.bfloat16)         # cast whole Q|K slab once
    v_b = qkv[:, W2D:].astype(jnp.bfloat16)    # cast whole V slab once

    mask = mask_ref[...]                       # (BS, BS) causal+batch bias, f32

    # ---- attention: per-head scores over the flattened token axis ----
    for hd in range(n_heads):                  # static unrolled (n_heads small)
        q_h = qk_b[:, hd * Dh:(hd + 1) * Dh]
        k_h = qk_b[:, D + hd * Dh:D + (hd + 1) * Dh]
        v_h = v_b[:, hd * Dh:(hd + 1) * Dh]
        s = jax.lax.dot_general(q_h, k_h, (((1,), (1,)), ((), ())),
                                preferred_element_type=jnp.float32)
        s = s * scale + mask                   # f32 scores + f32 mask bias
        m = jnp.max(s, axis=-1, keepdims=True)
        p = jnp.exp(s - m)
        p = p * pl.reciprocal(jnp.sum(p, axis=-1, keepdims=True), approx=True)
        # direct store at a static lane offset (no lane-concat of head outputs)
        attn_ref[:, hd * Dh:(hd + 1) * Dh] = jnp.dot(
            p.astype(jnp.bfloat16), v_h, preferred_element_type=jnp.float32)

    attn = jnp.dot(attn_ref[...].astype(jnp.bfloat16), wo_ref[0],
                   preferred_element_type=jnp.float32)           # (BS, D)
    x1 = x + attn                                                # residual 1

    # ---- RMSNorm 2 + packed SwiGLU (w1|w3) ----
    ms2 = jnp.mean(x1 * x1, axis=-1, keepdims=True)
    h2 = x1 * jax.lax.rsqrt(ms2 + eps) * nw2_ref[0]
    h13 = jnp.dot(h2.astype(jnp.bfloat16), w13_ref[0],
                  preferred_element_type=jnp.float32)            # (BS, 2*Hf)
    h1 = h13[:, :Hf]
    h3 = h13[:, Hf:]
    g = h1 * jax.nn.sigmoid(h1) * h3                             # SiLU gate, f32
    ffn = jnp.dot(g.astype(jnp.bfloat16), w2_ref[0],
                  preferred_element_type=jnp.float32)            # (BS, D)
    x2 = x1 + ffn                                                # residual 2

    resid_ref[...] = x2                        # stays resident in VMEM

    # ---- fused head on the last layer: output_norm + folded output_proj ----
    @pl.when(layer == n_layers - 1)
    def _():
        msn = jnp.mean(x2 * x2, axis=-1, keepdims=True)
        hn = x2 * jax.lax.rsqrt(msn + eps) * onw_ref[...]
        logits_ref[...] = jnp.dot(hn.astype(jnp.bfloat16), weff_ref[...],
                                  preferred_element_type=jnp.float32
                                  ).astype(logits_ref.dtype)


# ----------------------------------------------------------------------------
# Wrapper: one pallas_call for the whole forward
# ----------------------------------------------------------------------------

def _const_spec(shape):
    return pl.BlockSpec(shape, lambda l: (0,) * len(shape))


def _layer_spec(shape):
    return pl.BlockSpec(shape, lambda l: (l,) + (0,) * (len(shape) - 1))


class Cfg:
    n_blocks = 2
    vocab_size = 64
    context_length = 16
    model_dim = 32
    n_attn_heads = 4
    ffn_hidden_dim = 64
    ffn_hidden_dim_multiple_of = None
    k_config = "mha"
    v_config = "mha"
    kv_groups = None
    dropout_prob = 0.0
    bias = False
    norm_eps = 1e-5


def _rope_col_perm(n_heads, head_dim):
    # per head: [even feature indices..., odd feature indices...]
    idx = []
    for h in range(n_heads):
        base = h * head_dim
        idx += [base + j for j in range(0, head_dim, 2)]
        idx += [base + j for j in range(1, head_dim, 2)]
    return jnp.array(idx, dtype=jnp.int32)


def _rope_tables(cfg, B, S):
    """COS / SIN_A / SIN_B tables of shape (B*S, 2*D) for the joint Q|K slab."""
    D, nH = cfg.model_dim, cfg.n_attn_heads
    Dh = D // nH
    theta = 10000.0
    pos = jnp.arange(S, dtype=jnp.float32)[:, None]
    dim = jnp.arange(0, Dh, 2, dtype=jnp.float32)[None, :]
    freqs = pos * jnp.exp(dim * (-math.log(theta) / Dh))         # (S, Dh//2)
    c, s = jnp.cos(freqs), jnp.sin(freqs)
    z = jnp.zeros_like(s)
    cos_head = jnp.concatenate([c, c], axis=1)                   # (S, Dh)
    sina_head = jnp.concatenate([-s, z], axis=1)                 # even slots: -sin
    sinb_head = jnp.concatenate([z, s], axis=1)                  # odd slots:  +sin
    reps = 2 * nH                                                # Q heads then K heads
    cos = jnp.tile(cos_head, (B, reps))                          # (B*S, 2D)
    sina = jnp.tile(sina_head, (B, reps))
    sinb = jnp.tile(sinb_head, (B, reps))
    return cos, sina, sinb


def _attn_mask(B, S):
    """Causal + batch-block-diagonal bias over the flattened (B*S) token axis."""
    BS = B * S
    i = jnp.arange(BS)
    same_batch = (i[:, None] // S) == (i[None, :] // S)
    causal = i[None, :] <= i[:, None]
    return jnp.where(same_batch & causal, 0.0, -1e30).astype(jnp.float32)


def init_params(cfg, key):
    D, V, Hf = cfg.model_dim, cfg.vocab_size, cfg.ffn_hidden_dim
    nH, L = cfg.n_attn_heads, cfg.n_blocks
    Dh = D // nH
    std = 0.02
    proj_std = 0.02 / math.sqrt(2 * L)
    keys = iter(jax.random.split(key, 4 + 8 * L))

    def nrm(k, shape, s=std):
        return jax.random.normal(k, shape, dtype=jnp.float32) * s

    perm = _rope_col_perm(nH, Dh)

    out_w = nrm(next(keys), (2 * D, V))        # output_proj, (in, out) layout
    emb = nrm(next(keys), (V, D))
    wg = nrm(next(keys), (D, D))               # token_group_proj (x @ Wg)
    _ = next(keys)                             # token_group_encoder.projection unused (y=None)

    # fold the token-group projection into the output projection (both bias-free)
    w_eff = (out_w[:D] + wg @ out_w[D:]).astype(jnp.bfloat16)    # (D, V)

    norm1, wqkv, wo, norm2, w13, w2 = [], [], [], [], [], []
    for _layer in range(L):
        wq = nrm(next(keys), (D, D))[:, perm]  # column-permute for RoPE halves
        wk = nrm(next(keys), (D, D))[:, perm]
        wv = nrm(next(keys), (D, D))
        w1 = nrm(next(keys), (D, Hf))
        w3 = nrm(next(keys), (D, Hf))
        norm1.append(jnp.ones((1, D), jnp.float32))
        wqkv.append(jnp.concatenate([wq, wk, wv], axis=1))
        wo.append(nrm(next(keys), (D, D), proj_std))
        norm2.append(jnp.ones((1, D), jnp.float32))
        w13.append(jnp.concatenate([w1, w3], axis=1))
        w2.append(nrm(next(keys), (Hf, D), proj_std))

    return {
        "embedding": emb,
        "output_norm_w": jnp.ones((1, D), jnp.float32),
        "w_eff": w_eff,                                    # (D, V) bf16
        "norm1_w": jnp.stack(norm1),                       # (L, 1, D) f32
        "wqkv": jnp.stack(wqkv).astype(jnp.bfloat16),      # (L, D, 3D)
        "wo": jnp.stack(wo).astype(jnp.bfloat16),          # (L, D, D)
        "norm2_w": jnp.stack(norm2),                       # (L, 1, D) f32
        "w13": jnp.stack(w13).astype(jnp.bfloat16),        # (L, D, 2Hf)
        "w2": jnp.stack(w2).astype(jnp.bfloat16),          # (L, Hf, D)
    }


@functools.partial(jax.jit, static_argnums=(2,))
def transformer_forward(params, token_ids, cfg):
    """Inference path of Transformer.forward (y=None)."""
    B, S = token_ids.shape
    D, nH, V = cfg.model_dim, cfg.n_attn_heads, cfg.vocab_size
    L = params["wqkv"].shape[0]
    Hf = params["w2"].shape[1]
    Dh = D // nH
    BS = B * S

    # embedding gather + dropout(eval=identity) kept in JAX glue (no matmul)
    x = jnp.take(params["embedding"], token_ids.reshape(-1), axis=0)  # (BS, D)

    cos, sina, sinb = _rope_tables(cfg, B, S)                         # (BS, 2D)
    mask = _attn_mask(B, S)                                           # (BS, BS)

    kernel = functools.partial(_fwd_kernel, n_heads=nH, eps=cfg.norm_eps,
                               scale=1.0 / math.sqrt(Dh))

    logits_flat = pl.pallas_call(
        kernel,
        out_shape=jax.ShapeDtypeStruct((BS, V), jnp.float32),
        grid=(L,),
        in_specs=[
            _const_spec((BS, D)),             # embeddings
            _const_spec((BS, 2 * D)),         # cos
            _const_spec((BS, 2 * D)),         # sin_a
            _const_spec((BS, 2 * D)),         # sin_b
            _const_spec((BS, BS)),            # mask bias
            _layer_spec((1, 1, D)),           # norm1_w
            _layer_spec((1, D, 3 * D)),       # wqkv
            _layer_spec((1, D, D)),           # wo
            _layer_spec((1, 1, D)),           # norm2_w
            _layer_spec((1, D, 2 * Hf)),      # w13
            _layer_spec((1, Hf, D)),          # w2
            _const_spec((1, D)),              # output_norm_w
            _const_spec((D, V)),              # folded output head
        ],
        out_specs=pl.BlockSpec((BS, V), lambda l: (0, 0)),
        scratch_shapes=[
            pltpu.VMEM((BS, D), jnp.float32),     # resident residual stream
            pltpu.VMEM((BS, D), jnp.float32),     # per-head attention outputs
        ],
        compiler_params=pltpu.CompilerParams(
            dimension_semantics=("arbitrary",)),  # layers are sequential
    )(x, cos, sina, sinb, mask,
      params["norm1_w"], params["wqkv"], params["wo"],
      params["norm2_w"], params["w13"], params["w2"],
      params["output_norm_w"], params["w_eff"])

    # y is None -> only the last position's logits are returned
    logits = logits_flat.reshape(B, S, V)[:, -1:, :]                  # (B, 1, V)
    return {"logits": logits}


# ----------------------------------------------------------------------------
# main
# ----------------------------------------------------------------------------

if __name__ == "__main__":
    cfg = Cfg()
    key = jax.random.PRNGKey(0)
    pkey, dkey = jax.random.split(key)

    params = init_params(cfg, pkey)

    B, S = 2, 8
    token_ids = jax.random.randint(dkey, (B, S), 0, cfg.vocab_size,
                                   dtype=jnp.int32)

    out = transformer_forward(params, token_ids, cfg)
    logits = jax.block_until_ready(out["logits"])

    assert logits.shape == (B, 1, cfg.vocab_size)
    assert bool(jnp.all(jnp.isfinite(logits)))
    print("KERNEL_OK")
</pallas_src>

<mosaic_0001>
module attributes {stable_mosaic.version = 11 : i64} {
  func.func @_fwd_kernel(%arg0: i32, %arg1: memref<16x32xf32, #tpu.memory_space<vmem>>, %arg2: memref<16x64xf32, #tpu.memory_space<vmem>>, %arg3: memref<16x64xf32, #tpu.memory_space<vmem>>, %arg4: memref<16x64xf32, #tpu.memory_space<vmem>>, %arg5: memref<16x16xf32, #tpu.memory_space<vmem>>, %arg6: memref<1x1x32xf32, #tpu.memory_space<vmem>>, %arg7: memref<1x32x96xbf16, #tpu.memory_space<vmem>>, %arg8: memref<1x32x32xbf16, #tpu.memory_space<vmem>>, %arg9: memref<1x1x32xf32, #tpu.memory_space<vmem>>, %arg10: memref<1x32x128xbf16, #tpu.memory_space<vmem>>, %arg11: memref<1x64x32xbf16, #tpu.memory_space<vmem>>, %arg12: memref<1x32xf32, #tpu.memory_space<vmem>>, %arg13: memref<32x64xbf16, #tpu.memory_space<vmem>>, %arg14: memref<16x64xf32, #tpu.memory_space<vmem>>, %arg15: memref<16x32xf32, #tpu.memory_space<vmem>>, %arg16: memref<16x32xf32, #tpu.memory_space<vmem>>) attributes {dimension_semantics = [#tpu.dimension_semantics<arbitrary>], iteration_bounds = array<i64: 2>, scalar_prefetch = 0 : i64, scratch_operands = 2 : i64, tpu.core_type = #tpu.core_type<tc>, window_params = [{pipeline_mode = #tpu.pipeline_mode<synchronous>, transform_indices = @transform_0, window_bounds = array<i64: 16, 32>}, {pipeline_mode = #tpu.pipeline_mode<synchronous>, transform_indices = @transform_1, window_bounds = array<i64: 16, 64>}, {pipeline_mode = #tpu.pipeline_mode<synchronous>, transform_indices = @transform_2, window_bounds = array<i64: 16, 64>}, {pipeline_mode = #tpu.pipeline_mode<synchronous>, transform_indices = @transform_3, window_bounds = array<i64: 16, 64>}, {pipeline_mode = #tpu.pipeline_mode<synchronous>, transform_indices = @transform_4, window_bounds = array<i64: 16, 16>}, {transform_indices = @transform_5, window_bounds = array<i64: 1, 1, 32>}, {transform_indices = @transform_6, window_bounds = array<i64: 1, 32, 96>}, {transform_indices = @transform_7, window_bounds = array<i64: 1, 32, 32>}, {transform_indices = @transform_8, window_bounds = array<i64: 1, 1, 32>}, {transform_indices = @transform_9, window_bounds = array<i64: 1, 32, 128>}, {transform_indices = @transform_10, window_bounds = array<i64: 1, 64, 32>}, {pipeline_mode = #tpu.pipeline_mode<synchronous>, transform_indices = @transform_11, window_bounds = array<i64: 1, 32>}, {pipeline_mode = #tpu.pipeline_mode<synchronous>, transform_indices = @transform_12, window_bounds = array<i64: 32, 64>}, {pipeline_mode = #tpu.pipeline_mode<synchronous>, transform_indices = @transform_13, window_bounds = array<i64: 16, 64>}]} {
    %c0_i32 = arith.constant 0 : i32
    %0 = arith.cmpi eq, %arg0, %c0_i32 : i32
    %1 = arith.extui %0 : i1 to i32
    %c0_i32_0 = arith.constant 0 : i32
    %2 = arith.cmpi ne, %1, %c0_i32_0 : i32
    scf.if %2 {
      %c0_68 = arith.constant 0 : index
      %c0_69 = arith.constant 0 : index
      %163 = vector.load %arg1[%c0_68, %c0_69] : memref<16x32xf32, #tpu.memory_space<vmem>>, vector<16x32xf32>
      %c0_70 = arith.constant 0 : index
      %c0_71 = arith.constant 0 : index
      %164 = vector.load %arg15[%c0_70, %c0_71] : memref<16x32xf32, #tpu.memory_space<vmem>>, vector<16x32xf32>
      tpu.vector_store %arg15[%c0_70, %c0_71], %163 {strides = array<i32>} : memref<16x32xf32, #tpu.memory_space<vmem>>, vector<16x32xf32>,
    } else {
    }
    %c0 = arith.constant 0 : index
    %c0_1 = arith.constant 0 : index
    %3 = vector.load %arg15[%c0, %c0_1] : memref<16x32xf32, #tpu.memory_space<vmem>>, vector<16x32xf32>
    %4 = arith.mulf %3, %3 : vector<16x32xf32>
    %cst = arith.constant dense<0.000000e+00> : vector<16xf32>
    %5 = vector.multi_reduction <add>, %4, %cst [1] : vector<16x32xf32> to vector<16xf32>
    %6 = vector.shape_cast %5 : vector<16xf32> to vector<16x1xf32>
    %cst_2 = arith.constant 3.200000e+01 : f32
    %7 = vector.broadcast %cst_2 : f32 to vector<16x1xf32>
    %8 = arith.divf %6, %7 : vector<16x1xf32>
    %cst_3 = arith.constant 9.99999974E-6 : f32
    %9 = vector.broadcast %cst_3 : f32 to vector<16x1xf32>
    %10 = arith.addf %8, %9 : vector<16x1xf32>
    %11 = math.rsqrt %10 : vector<16x1xf32>
    %12 = vector.broadcast %11 : vector<16x1xf32> to vector<16x32xf32>
    %13 = arith.mulf %3, %12 : vector<16x32xf32>
    %c0_4 = arith.constant 0 : index
    %c0_5 = arith.constant 0 : index
    %c0_6 = arith.constant 0 : index
    %14 = vector.load %arg6[%c0_4, %c0_5, %c0_6] : memref<1x1x32xf32, #tpu.memory_space<vmem>>, vector<1x1x32xf32>
    %15 = vector.shape_cast %14 : vector<1x1x32xf32> to vector<1x32xf32>
    %16 = vector.broadcast %15 : vector<1x32xf32> to vector<16x32xf32>
    %17 = arith.mulf %13, %16 : vector<16x32xf32>
    %18 = arith.truncf %17 : vector<16x32xf32> to vector<16x32xbf16>
    %c0_7 = arith.constant 0 : index
    %c0_8 = arith.constant 0 : index
    %c0_9 = arith.constant 0 : index
    %19 = vector.load %arg7[%c0_7, %c0_8, %c0_9] : memref<1x32x96xbf16, #tpu.memory_space<vmem>>, vector<1x32x96xbf16>
    %20 = vector.shape_cast %19 : vector<1x32x96xbf16> to vector<32x96xbf16>
    %cst_10 = arith.constant dense<0.000000e+00> : vector<16x96xf32>
    %21 = tpu.matmul %18, %20, %cst_10 {dimension_numbers = #tpu.dot_dimension_numbers<[1], [0], [0], [1], [0, 0, 1, 1], [], []>} : vector<16x32xbf16>, vector<32x96xbf16>, vector<16x96xf32> -> vector<16x96xf32>
    %22 = vector.extract_strided_slice %21 {offsets = [0, 0], sizes = [16, 64], strides = [1, 1]} : vector<16x96xf32> to vector<16x64xf32>
    %23 = vector.extract_strided_slice %22 {offsets = [0, 4], sizes = [16, 60], strides = [1, 1]} : vector<16x64xf32> to vector<16x60xf32>
    %24 = vector.extract_strided_slice %22 {offsets = [0, 0], sizes = [16, 4], strides = [1, 1]} : vector<16x64xf32> to vector<16x4xf32>
    %25 = tpu.concatenate %23, %24 in 1 : vector<16x60xf32>, vector<16x4xf32> -> vector<16x64xf32>
    %26 = vector.extract_strided_slice %22 {offsets = [0, 60], sizes = [16, 4], strides = [1, 1]} : vector<16x64xf32> to vector<16x4xf32>
    %27 = vector.extract_strided_slice %22 {offsets = [0, 0], sizes = [16, 60], strides = [1, 1]} : vector<16x64xf32> to vector<16x60xf32>
    %28 = tpu.concatenate %26, %27 in 1 : vector<16x4xf32>, vector<16x60xf32> -> vector<16x64xf32>
    %c0_11 = arith.constant 0 : index
    %c0_12 = arith.constant 0 : index
    %29 = vector.load %arg2[%c0_11, %c0_12] : memref<16x64xf32, #tpu.memory_space<vmem>>, vector<16x64xf32>
    %30 = arith.mulf %22, %29 : vector<16x64xf32>
    %c0_13 = arith.constant 0 : index
    %c0_14 = arith.constant 0 : index
    %31 = vector.load %arg3[%c0_13, %c0_14] : memref<16x64xf32, #tpu.memory_space<vmem>>, vector<16x64xf32>
    %32 = arith.mulf %25, %31 : vector<16x64xf32>
    %33 = arith.addf %30, %32 : vector<16x64xf32>
    %c0_15 = arith.constant 0 : index
    %c0_16 = arith.constant 0 : index
    %34 = vector.load %arg4[%c0_15, %c0_16] : memref<16x64xf32, #tpu.memory_space<vmem>>, vector<16x64xf32>
    %35 = arith.mulf %28, %34 : vector<16x64xf32>
    %36 = arith.addf %33, %35 : vector<16x64xf32>
    %37 = arith.truncf %36 : vector<16x64xf32> to vector<16x64xbf16>
    %38 = vector.extract_strided_slice %21 {offsets = [0, 64], sizes = [16, 32], strides = [1, 1]} : vector<16x96xf32> to vector<16x32xf32>
    %39 = arith.truncf %38 : vector<16x32xf32> to vector<16x32xbf16>
    %c0_17 = arith.constant 0 : index
    %c0_18 = arith.constant 0 : index
    %40 = vector.load %arg5[%c0_17, %c0_18] : memref<16x16xf32, #tpu.memory_space<vmem>>, vector<16x16xf32>
    %41 = vector.extract_strided_slice %37 {offsets = [0, 0], sizes = [16, 8], strides = [1, 1]} : vector<16x64xbf16> to vector<16x8xbf16>
    %42 = vector.extract_strided_slice %37 {offsets = [0, 32], sizes = [16, 8], strides = [1, 1]} : vector<16x64xbf16> to vector<16x8xbf16>
    %43 = vector.extract_strided_slice %39 {offsets = [0, 0], sizes = [16, 8], strides = [1, 1]} : vector<16x32xbf16> to vector<16x8xbf16>
    %cst_19 = arith.constant dense<0.000000e+00> : vector<16x16xf32>
    %44 = tpu.matmul %41, %42, %cst_19 {dimension_numbers = #tpu.dot_dimension_numbers<[1], [1], [0], [0], [0, 0, 1, 0], [], []>} : vector<16x8xbf16>, vector<16x8xbf16>, vector<16x16xf32> -> vector<16x16xf32>
    %cst_20 = arith.constant 0.353553385 : f32
    %45 = vector.broadcast %cst_20 : f32 to vector<16x16xf32>
    %46 = arith.mulf %44, %45 : vector<16x16xf32>
    %47 = arith.addf %46, %40 : vector<16x16xf32>
    %cst_21 = arith.constant dense<0xFF800000> : vector<16xf32>
    %48 = vector.multi_reduction <maximumf>, %47, %cst_21 [1] : vector<16x16xf32> to vector<16xf32>
    %49 = vector.shape_cast %48 : vector<16xf32> to vector<16x1xf32>
    %50 = vector.broadcast %49 : vector<16x1xf32> to vector<16x16xf32>
    %51 = arith.subf %47, %50 : vector<16x16xf32>
    %52 = math.exp %51 : vector<16x16xf32>
    %cst_22 = arith.constant dense<0.000000e+00> : vector<16xf32>
    %53 = vector.multi_reduction <add>, %52, %cst_22 [1] : vector<16x16xf32> to vector<16xf32>
    %54 = vector.shape_cast %53 : vector<16xf32> to vector<16x1xf32>
    %55 = tpu.reciprocal %54 {approx = true} : vector<16x1xf32> -> vector<16x1xf32>
    %56 = vector.broadcast %55 : vector<16x1xf32> to vector<16x16xf32>
    %57 = arith.mulf %52, %56 : vector<16x16xf32>
    %58 = arith.truncf %57 : vector<16x16xf32> to vector<16x16xbf16>
    %cst_23 = arith.constant dense<0.000000e+00> : vector<16x8xf32>
    %59 = tpu.matmul %58, %43, %cst_23 {dimension_numbers = #tpu.dot_dimension_numbers<[1], [0], [0], [1], [0, 0, 1, 1], [], []>} : vector<16x16xbf16>, vector<16x8xbf16>, vector<16x8xf32> -> vector<16x8xf32>
    %c0_24 = arith.constant 0 : index
    %c0_25 = arith.constant 0 : index
    %60 = vector.load %arg16[%c0_24, %c0_25] : memref<16x32xf32, #tpu.memory_space<vmem>>, vector<16x8xf32>
    tpu.vector_store %arg16[%c0_24, %c0_25], %59 {strides = array<i32>} : memref<16x32xf32, #tpu.memory_space<vmem>>, vector<16x8xf32>,
    %61 = vector.extract_strided_slice %37 {offsets = [0, 8], sizes = [16, 8], strides = [1, 1]} : vector<16x64xbf16> to vector<16x8xbf16>
    %62 = vector.extract_strided_slice %37 {offsets = [0, 40], sizes = [16, 8], strides = [1, 1]} : vector<16x64xbf16> to vector<16x8xbf16>
    %63 = vector.extract_strided_slice %39 {offsets = [0, 8], sizes = [16, 8], strides = [1, 1]} : vector<16x32xbf16> to vector<16x8xbf16>
    %cst_26 = arith.constant dense<0.000000e+00> : vector<16x16xf32>
    %64 = tpu.matmul %61, %62, %cst_26 {dimension_numbers = #tpu.dot_dimension_numbers<[1], [1], [0], [0], [0, 0, 1, 0], [], []>} : vector<16x8xbf16>, vector<16x8xbf16>, vector<16x16xf32> -> vector<16x16xf32>
    %cst_27 = arith.constant 0.353553385 : f32
    %65 = vector.broadcast %cst_27 : f32 to vector<16x16xf32>
    %66 = arith.mulf %64, %65 : vector<16x16xf32>
    %67 = arith.addf %66, %40 : vector<16x16xf32>
    %cst_28 = arith.constant dense<0xFF800000> : vector<16xf32>
    %68 = vector.multi_reduction <maximumf>, %67, %cst_28 [1] : vector<16x16xf32> to vector<16xf32>
    %69 = vector.shape_cast %68 : vector<16xf32> to vector<16x1xf32>
    %70 = vector.broadcast %69 : vector<16x1xf32> to vector<16x16xf32>
    %71 = arith.subf %67, %70 : vector<16x16xf32>
    %72 = math.exp %71 : vector<16x16xf32>
    %cst_29 = arith.constant dense<0.000000e+00> : vector<16xf32>
    %73 = vector.multi_reduction <add>, %72, %cst_29 [1] : vector<16x16xf32> to vector<16xf32>
    %74 = vector.shape_cast %73 : vector<16xf32> to vector<16x1xf32>
    %75 = tpu.reciprocal %74 {approx = true} : vector<16x1xf32> -> vector<16x1xf32>
    %76 = vector.broadcast %75 : vector<16x1xf32> to vector<16x16xf32>
    %77 = arith.mulf %72, %76 : vector<16x16xf32>
    %78 = arith.truncf %77 : vector<16x16xf32> to vector<16x16xbf16>
    %cst_30 = arith.constant dense<0.000000e+00> : vector<16x8xf32>
    %79 = tpu.matmul %78, %63, %cst_30 {dimension_numbers = #tpu.dot_dimension_numbers<[1], [0], [0], [1], [0, 0, 1, 1], [], []>} : vector<16x16xbf16>, vector<16x8xbf16>, vector<16x8xf32> -> vector<16x8xf32>
    %c0_31 = arith.constant 0 : index
    %c8 = arith.constant 8 : index
    %80 = vector.load %arg16[%c0_31, %c8] : memref<16x32xf32, #tpu.memory_space<vmem>>, vector<16x8xf32>
    tpu.vector_store %arg16[%c0_31, %c8], %79 {strides = array<i32>} : memref<16x32xf32, #tpu.memory_space<vmem>>, vector<16x8xf32>,
    %81 = vector.extract_strided_slice %37 {offsets = [0, 16], sizes = [16, 8], strides = [1, 1]} : vector<16x64xbf16> to vector<16x8xbf16>
    %82 = vector.extract_strided_slice %37 {offsets = [0, 48], sizes = [16, 8], strides = [1, 1]} : vector<16x64xbf16> to vector<16x8xbf16>
    %83 = vector.extract_strided_slice %39 {offsets = [0, 16], sizes = [16, 8], strides = [1, 1]} : vector<16x32xbf16> to vector<16x8xbf16>
    %cst_32 = arith.constant dense<0.000000e+00> : vector<16x16xf32>
    %84 = tpu.matmul %81, %82, %cst_32 {dimension_numbers = #tpu.dot_dimension_numbers<[1], [1], [0], [0], [0, 0, 1, 0], [], []>} : vector<16x8xbf16>, vector<16x8xbf16>, vector<16x16xf32> -> vector<16x16xf32>
    %cst_33 = arith.constant 0.353553385 : f32
    %85 = vector.broadcast %cst_33 : f32 to vector<16x16xf32>
    %86 = arith.mulf %84, %85 : vector<16x16xf32>
    %87 = arith.addf %86, %40 : vector<16x16xf32>
    %cst_34 = arith.constant dense<0xFF800000> : vector<16xf32>
    %88 = vector.multi_reduction <maximumf>, %87, %cst_34 [1] : vector<16x16xf32> to vector<16xf32>
    %89 = vector.shape_cast %88 : vector<16xf32> to vector<16x1xf32>
    %90 = vector.broadcast %89 : vector<16x1xf32> to vector<16x16xf32>
    %91 = arith.subf %87, %90 : vector<16x16xf32>
    %92 = math.exp %91 : vector<16x16xf32>
    %cst_35 = arith.constant dense<0.000000e+00> : vector<16xf32>
    %93 = vector.multi_reduction <add>, %92, %cst_35 [1] : vector<16x16xf32> to vector<16xf32>
    %94 = vector.shape_cast %93 : vector<16xf32> to vector<16x1xf32>
    %95 = tpu.reciprocal %94 {approx = true} : vector<16x1xf32> -> vector<16x1xf32>
    %96 = vector.broadcast %95 : vector<16x1xf32> to vector<16x16xf32>
    %97 = arith.mulf %92, %96 : vector<16x16xf32>
    %98 = arith.truncf %97 : vector<16x16xf32> to vector<16x16xbf16>
    %cst_36 = arith.constant dense<0.000000e+00> : vector<16x8xf32>
    %99 = tpu.matmul %98, %83, %cst_36 {dimension_numbers = #tpu.dot_dimension_numbers<[1], [0], [0], [1], [0, 0, 1, 1], [], []>} : vector<16x16xbf16>, vector<16x8xbf16>, vector<16x8xf32> -> vector<16x8xf32>
    %c0_37 = arith.constant 0 : index
    %c16 = arith.constant 16 : index
    %100 = vector.load %arg16[%c0_37, %c16] : memref<16x32xf32, #tpu.memory_space<vmem>>, vector<16x8xf32>
    tpu.vector_store %arg16[%c0_37, %c16], %99 {strides = array<i32>} : memref<16x32xf32, #tpu.memory_space<vmem>>, vector<16x8xf32>,
    %101 = vector.extract_strided_slice %37 {offsets = [0, 24], sizes = [16, 8], strides = [1, 1]} : vector<16x64xbf16> to vector<16x8xbf16>
    %102 = vector.extract_strided_slice %37 {offsets = [0, 56], sizes = [16, 8], strides = [1, 1]} : vector<16x64xbf16> to vector<16x8xbf16>
    %103 = vector.extract_strided_slice %39 {offsets = [0, 24], sizes = [16, 8], strides = [1, 1]} : vector<16x32xbf16> to vector<16x8xbf16>
    %cst_38 = arith.constant dense<0.000000e+00> : vector<16x16xf32>
    %104 = tpu.matmul %101, %102, %cst_38 {dimension_numbers = #tpu.dot_dimension_numbers<[1], [1], [0], [0], [0, 0, 1, 0], [], []>} : vector<16x8xbf16>, vector<16x8xbf16>, vector<16x16xf32> -> vector<16x16xf32>
    %cst_39 = arith.constant 0.353553385 : f32
    %105 = vector.broadcast %cst_39 : f32 to vector<16x16xf32>
    %106 = arith.mulf %104, %105 : vector<16x16xf32>
    %107 = arith.addf %106, %40 : vector<16x16xf32>
    %cst_40 = arith.constant dense<0xFF800000> : vector<16xf32>
    %108 = vector.multi_reduction <maximumf>, %107, %cst_40 [1] : vector<16x16xf32> to vector<16xf32>
    %109 = vector.shape_cast %108 : vector<16xf32> to vector<16x1xf32>
    %110 = vector.broadcast %109 : vector<16x1xf32> to vector<16x16xf32>
    %111 = arith.subf %107, %110 : vector<16x16xf32>
    %112 = math.exp %111 : vector<16x16xf32>
    %cst_41 = arith.constant dense<0.000000e+00> : vector<16xf32>
    %113 = vector.multi_reduction <add>, %112, %cst_41 [1] : vector<16x16xf32> to vector<16xf32>
    %114 = vector.shape_cast %113 : vector<16xf32> to vector<16x1xf32>
    %115 = tpu.reciprocal %114 {approx = true} : vector<16x1xf32> -> vector<16x1xf32>
    %116 = vector.broadcast %115 : vector<16x1xf32> to vector<16x16xf32>
    %117 = arith.mulf %112, %116 : vector<16x16xf32>
    %118 = arith.truncf %117 : vector<16x16xf32> to vector<16x16xbf16>
    %cst_42 = arith.constant dense<0.000000e+00> : vector<16x8xf32>
    %119 = tpu.matmul %118, %103, %cst_42 {dimension_numbers = #tpu.dot_dimension_numbers<[1], [0], [0], [1], [0, 0, 1, 1], [], []>} : vector<16x16xbf16>, vector<16x8xbf16>, vector<16x8xf32> -> vector<16x8xf32>
    %c0_43 = arith.constant 0 : index
    %c24 = arith.constant 24 : index
    %120 = vector.load %arg16[%c0_43, %c24] : memref<16x32xf32, #tpu.memory_space<vmem>>, vector<16x8xf32>
    tpu.vector_store %arg16[%c0_43, %c24], %119 {strides = array<i32>} : memref<16x32xf32, #tpu.memory_space<vmem>>, vector<16x8xf32>,
    %c0_44 = arith.constant 0 : index
    %c0_45 = arith.constant 0 : index
    %121 = vector.load %arg16[%c0_44, %c0_45] : memref<16x32xf32, #tpu.memory_space<vmem>>, vector<16x32xf32>
    %122 = arith.truncf %121 : vector<16x32xf32> to vector<16x32xbf16>
    %c0_46 = arith.constant 0 : index
    %c0_47 = arith.constant 0 : index
    %c0_48 = arith.constant 0 : index
    %123 = vector.load %arg8[%c0_46, %c0_47, %c0_48] : memref<1x32x32xbf16, #tpu.memory_space<vmem>>, vector<1x32x32xbf16>
    %124 = vector.shape_cast %123 : vector<1x32x32xbf16> to vector<32x32xbf16>
    %cst_49 = arith.constant dense<0.000000e+00> : vector<16x32xf32>
    %125 = tpu.matmul %122, %124, %cst_49 {dimension_numbers = #tpu.dot_dimension_numbers<[1], [0], [0], [1], [0, 0, 1, 1], [], []>} : vector<16x32xbf16>, vector<32x32xbf16>, vector<16x32xf32> -> vector<16x32xf32>
    %126 = arith.addf %3, %125 : vector<16x32xf32>
    %127 = arith.mulf %126, %126 : vector<16x32xf32>
    %cst_50 = arith.constant dense<0.000000e+00> : vector<16xf32>
    %128 = vector.multi_reduction <add>, %127, %cst_50 [1] : vector<16x32xf32> to vector<16xf32>
    %129 = vector.shape_cast %128 : vector<16xf32> to vector<16x1xf32>
    %cst_51 = arith.constant 3.200000e+01 : f32
    %130 = vector.broadcast %cst_51 : f32 to vector<16x1xf32>
    %131 = arith.divf %129, %130 : vector<16x1xf32>
    %cst_52 = arith.constant 9.99999974E-6 : f32
    %132 = vector.broadcast %cst_52 : f32 to vector<16x1xf32>
    %133 = arith.addf %131, %132 : vector<16x1xf32>
    %134 = math.rsqrt %133 : vector<16x1xf32>
    %135 = vector.broadcast %134 : vector<16x1xf32> to vector<16x32xf32>
    %136 = arith.mulf %126, %135 : vector<16x32xf32>
    %c0_53 = arith.constant 0 : index
    %c0_54 = arith.constant 0 : index
    %c0_55 = arith.constant 0 : index
    %137 = vector.load %arg9[%c0_53, %c0_54, %c0_55] : memref<1x1x32xf32, #tpu.memory_space<vmem>>, vector<1x1x32xf32>
    %138 = vector.shape_cast %137 : vector<1x1x32xf32> to vector<1x32xf32>
    %139 = vector.broadcast %138 : vector<1x32xf32> to vector<16x32xf32>
    %140 = arith.mulf %136, %139 : vector<16x32xf32>
    %141 = arith.truncf %140 : vector<16x32xf32> to vector<16x32xbf16>
    %c0_56 = arith.constant 0 : index
    %c0_57 = arith.constant 0 : index
    %c0_58 = arith.constant 0 : index
    %142 = vector.load %arg10[%c0_56, %c0_57, %c0_58] : memref<1x32x128xbf16, #tpu.memory_space<vmem>>, vector<1x32x128xbf16>
    %143 = vector.shape_cast %142 : vector<1x32x128xbf16> to vector<32x128xbf16>
    %cst_59 = arith.constant dense<0.000000e+00> : vector<16x128xf32>
    %144 = tpu.matmul %141, %143, %cst_59 {dimension_numbers = #tpu.dot_dimension_numbers<[1], [0], [0], [1], [0, 0, 1, 1], [], []>} : vector<16x32xbf16>, vector<32x128xbf16>, vector<16x128xf32> -> vector<16x128xf32>
    %145 = vector.extract_strided_slice %144 {offsets = [0, 0], sizes = [16, 64], strides = [1, 1]} : vector<16x128xf32> to vector<16x64xf32>
    %146 = vector.extract_strided_slice %144 {offsets = [0, 64], sizes = [16, 64], strides = [1, 1]} : vector<16x128xf32> to vector<16x64xf32>
    %147 = arith.negf %145 : vector<16x64xf32>
    %148 = math.exp %147 : vector<16x64xf32>
    %cst_60 = arith.constant 1.000000e+00 : f32
    %149 = vector.broadcast %cst_60 : f32 to vector<16x64xf32>
    %150 = arith.addf %149, %148 : vector<16x64xf32>
    %151 = arith.divf %149, %150 : vector<16x64xf32>
    %152 = arith.mulf %145, %151 : vector<16x64xf32>
    %153 = arith.mulf %152, %146 : vector<16x64xf32>
    %154 = arith.truncf %153 : vector<16x64xf32> to vector<16x64xbf16>
    %c0_61 = arith.constant 0 : index
    %c0_62 = arith.constant 0 : index
    %c0_63 = arith.constant 0 : index
    %155 = vector.load %arg11[%c0_61, %c0_62, %c0_63] : memref<1x64x32xbf16, #tpu.memory_space<vmem>>, vector<1x64x32xbf16>
    %156 = vector.shape_cast %155 : vector<1x64x32xbf16> to vector<64x32xbf16>
    %cst_64 = arith.constant dense<0.000000e+00> : vector<16x32xf32>
    %157 = tpu.matmul %154, %156, %cst_64 {dimension_numbers = #tpu.dot_dimension_numbers<[1], [0], [0], [1], [0, 0, 1, 1], [], []>} : vector<16x64xbf16>, vector<64x32xbf16>, vector<16x32xf32> -> vector<16x32xf32>
    %158 = arith.addf %126, %157 : vector<16x32xf32>
    %c0_65 = arith.constant 0 : index
    %c0_66 = arith.constant 0 : index
    %159 = vector.load %arg15[%c0_65, %c0_66] : memref<16x32xf32, #tpu.memory_space<vmem>>, vector<16x32xf32>
    tpu.vector_store %arg15[%c0_65, %c0_66], %158 {strides = array<i32>} : memref<16x32xf32, #tpu.memory_space<vmem>>, vector<16x32xf32>,
    %c1_i32 = arith.constant 1 : i32
    %160 = arith.cmpi eq, %arg0, %c1_i32 : i32
    %161 = arith.extui %160 : i1 to i32
    %c0_i32_67 = arith.constant 0 : i32
    %162 = arith.cmpi ne, %161, %c0_i32_67 : i32
    scf.if %162 {
      %163 = arith.mulf %158, %158 : vector<16x32xf32>
      %cst_68 = arith.constant dense<0.000000e+00> : vector<16xf32>
      %164 = vector.multi_reduction <add>, %163, %cst_68 [1] : vector<16x32xf32> to vector<16xf32>
      %165 = vector.shape_cast %164 : vector<16xf32> to vector<16x1xf32>
      %cst_69 = arith.constant 3.200000e+01 : f32
      %166 = vector.broadcast %cst_69 : f32 to vector<16x1xf32>
      %167 = arith.divf %165, %166 : vector<16x1xf32>
      %cst_70 = arith.constant 9.99999974E-6 : f32
      %168 = vector.broadcast %cst_70 : f32 to vector<16x1xf32>
      %169 = arith.addf %167, %168 : vector<16x1xf32>
      %170 = math.rsqrt %169 : vector<16x1xf32>
      %171 = vector.broadcast %170 : vector<16x1xf32> to vector<16x32xf32>
      %172 = arith.mulf %158, %171 : vector<16x32xf32>
      %c0_71 = arith.constant 0 : index
      %c0_72 = arith.constant 0 : index
      %173 = vector.load %arg12[%c0_71, %c0_72] : memref<1x32xf32, #tpu.memory_space<vmem>>, vector<1x32xf32>
      %174 = vector.broadcast %173 : vector<1x32xf32> to vector<16x32xf32>
      %175 = arith.mulf %172, %174 : vector<16x32xf32>
      %176 = arith.truncf %175 : vector<16x32xf32> to vector<16x32xbf16>
      %c0_73 = arith.constant 0 : index
      %c0_74 = arith.constant 0 : index
      %177 = vector.load %arg13[%c0_73, %c0_74] : memref<32x64xbf16, #tpu.memory_space<vmem>>, vector<32x64xbf16>
      %cst_75 = arith.constant dense<0.000000e+00> : vector<16x64xf32>
      %178 = tpu.matmul %176, %177, %cst_75 {dimension_numbers = #tpu.dot_dimension_numbers<[1], [0], [0], [1], [0, 0, 1, 1], [], []>} : vector<16x32xbf16>, vector<32x64xbf16>, vector<16x64xf32> -> vector<16x64xf32>
      %c0_76 = arith.constant 0 : index
      %c0_77 = arith.constant 0 : index
      %179 = vector.load %arg14[%c0_76, %c0_77] : memref<16x64xf32, #tpu.memory_space<vmem>>, vector<16x64xf32>
      tpu.vector_store %arg14[%c0_76, %c0_77], %178 {strides = array<i32>} : memref<16x64xf32, #tpu.memory_space<vmem>>, vector<16x64xf32>,
    } else {
    }
    return
  }
  func.func @transform_0(%arg0: i32) -> (i32, i32) {
    %c0_i32 = arith.constant 0 : i32
    %c0_i32_0 = arith.constant 0 : i32
    %c0_i32_1 = arith.constant 0 : i32
    return %c0_i32, %c0_i32_0 : i32, i32
  }
  func.func @transform_1(%arg0: i32) -> (i32, i32) {
    %c0_i32 = arith.constant 0 : i32
    %c0_i32_0 = arith.constant 0 : i32
    %c0_i32_1 = arith.constant 0 : i32
    return %c0_i32, %c0_i32_0 : i32, i32
  }
  func.func @transform_2(%arg0: i32) -> (i32, i32) {
    %c0_i32 = arith.constant 0 : i32
    %c0_i32_0 = arith.constant 0 : i32
    %c0_i32_1 = arith.constant 0 : i32
    return %c0_i32, %c0_i32_0 : i32, i32
  }
  func.func @transform_3(%arg0: i32) -> (i32, i32) {
    %c0_i32 = arith.constant 0 : i32
    %c0_i32_0 = arith.constant 0 : i32
    %c0_i32_1 = arith.constant 0 : i32
    return %c0_i32, %c0_i32_0 : i32, i32
  }
  func.func @transform_4(%arg0: i32) -> (i32, i32) {
    %c0_i32 = arith.constant 0 : i32
    %c0_i32_0 = arith.constant 0 : i32
    %c0_i32_1 = arith.constant 0 : i32
    return %c0_i32, %c0_i32_0 : i32, i32
  }
  func.func @transform_5(%arg0: i32) -> (i32, i32, i32) {
    %c0_i32 = arith.constant 0 : i32
    %c0_i32_0 = arith.constant 0 : i32
    %c0_i32_1 = arith.constant 0 : i32
    return %arg0, %c0_i32, %c0_i32_0 : i32, i32, i32
  }
  func.func @transform_6(%arg0: i32) -> (i32, i32, i32) {
    %c0_i32 = arith.constant 0 : i32
    %c0_i32_0 = arith.constant 0 : i32
    %c0_i32_1 = arith.constant 0 : i32
    return %arg0, %c0_i32, %c0_i32_0 : i32, i32, i32
  }
  func.func @transform_7(%arg0: i32) -> (i32, i32, i32) {
    %c0_i32 = arith.constant 0 : i32
    %c0_i32_0 = arith.constant 0 : i32
    %c0_i32_1 = arith.constant 0 : i32
    return %arg0, %c0_i32, %c0_i32_0 : i32, i32, i32
  }
  func.func @transform_8(%arg0: i32) -> (i32, i32, i32) {
    %c0_i32 = arith.constant 0 : i32
    %c0_i32_0 = arith.constant 0 : i32
    %c0_i32_1 = arith.constant 0 : i32
    return %arg0, %c0_i32, %c0_i32_0 : i32, i32, i32
  }
  func.func @transform_9(%arg0: i32) -> (i32, i32, i32) {
    %c0_i32 = arith.constant 0 : i32
    %c0_i32_0 = arith.constant 0 : i32
    %c0_i32_1 = arith.constant 0 : i32
    return %arg0, %c0_i32, %c0_i32_0 : i32, i32, i32
  }
  func.func @transform_10(%arg0: i32) -> (i32, i32, i32) {
    %c0_i32 = arith.constant 0 : i32
    %c0_i32_0 = arith.constant 0 : i32
    %c0_i32_1 = arith.constant 0 : i32
    return %arg0, %c0_i32, %c0_i32_0 : i32, i32, i32
  }
  func.func @transform_11(%arg0: i32) -> (i32, i32) {
    %c0_i32 = arith.constant 0 : i32
    %c0_i32_0 = arith.constant 0 : i32
    %c0_i32_1 = arith.constant 0 : i32
    return %c0_i32, %c0_i32_0 : i32, i32
  }
  func.func @transform_12(%arg0: i32) -> (i32, i32) {
    %c0_i32 = arith.constant 0 : i32
    %c0_i32_0 = arith.constant 0 : i32
    %c0_i32_1 = arith.constant 0 : i32
    return %c0_i32, %c0_i32_0 : i32, i32
  }
  func.func @transform_13(%arg0: i32) -> (i32, i32) {
    %c0_i32 = arith.constant 0 : i32
    %c0_i32_0 = arith.constant 0 : i32
    %c0_i32_1 = arith.constant 0 : i32
    return %c0_i32, %c0_i32_0 : i32, i32
  }
}

</mosaic_0001>

<llo_original>
// kernel: tile.18
$region0: #{tile.18}
  #allocation0 [shape = 's32[1]{0}', space=sflag, size = 0x4, scoped, tag = 'scoped memory for tile.18']
  %s0 = inlined_call_operand.vmem [shape: f32[8,8], index: 0, kind: input, shape index: {}]
  %s1 = inlined_call_operand.vmem [shape: f32[2,8,8,8], index: 1, kind: output, shape index: {}]
  // Predicated region
  $region2: #{tile.18} parent=0 // pred_check
    _
  $region3: #{tile.18} parent=0 // pred_check_branch
    %3 = sbr.rel (0) target = $region5
  $region4: #{tile.18} parent=0 // pred_region
    _
  $region5: #{tile.18} parent=0 // pred_fallthru
    _
  %v4 = vld [vmem:[%s0] ss:$0 sm:$0xff]
  %5 = vst [vmem:[%s1] sm:$0xff] %v4
  %s6 = scalar_lea.vmem %s1, 64
  %7 = vst [vmem:[%s6] sm:$0xff] %v4
  %s8 = scalar_lea.vmem %s0, 1
  %v9 = vld [vmem:[%s8] ss:$0 sm:$0xff]
  %s10 = scalar_lea.vmem %s1, 8
  %11 = vst [vmem:[%s10] sm:$0xff] %v9
  %s12 = scalar_lea.vmem %s1, 72
  %13 = vst [vmem:[%s12] sm:$0xff] %v9
  %s14 = scalar_lea.vmem %s0, 2
  %v15 = vld [vmem:[%s14] ss:$0 sm:$0xff]
  %s16 = scalar_lea.vmem %s1, 16
  %17 = vst [vmem:[%s16] sm:$0xff] %v15
  %s18 = scalar_lea.vmem %s1, 80
  %19 = vst [vmem:[%s18] sm:$0xff] %v15
  %s20 = scalar_lea.vmem %s0, 3
  %v21 = vld [vmem:[%s20] ss:$0 sm:$0xff]
  %s22 = scalar_lea.vmem %s1, 24
  %23 = vst [vmem:[%s22] sm:$0xff] %v21
  %s24 = scalar_lea.vmem %s1, 88
  %25 = vst [vmem:[%s24] sm:$0xff] %v21
  %s26 = scalar_lea.vmem %s0, 4
  %v27 = vld [vmem:[%s26] ss:$0 sm:$0xff]
  %s28 = scalar_lea.vmem %s1, 32
  %29 = vst [vmem:[%s28] sm:$0xff] %v27
  %s30 = scalar_lea.vmem %s1, 96
  %31 = vst [vmem:[%s30] sm:$0xff] %v27
  %s32 = scalar_lea.vmem %s0, 5
  %v33 = vld [vmem:[%s32] ss:$0 sm:$0xff]
  %s34 = scalar_lea.vmem %s1, 40
  %35 = vst [vmem:[%s34] sm:$0xff] %v33
  %s36 = scalar_lea.vmem %s1, 104
  %37 = vst [vmem:[%s36] sm:$0xff] %v33
  %s38 = scalar_lea.vmem %s0, 6
  %v39 = vld [vmem:[%s38] ss:$0 sm:$0xff]
  %s40 = scalar_lea.vmem %s1, 48
  %41 = vst [vmem:[%s40] sm:$0xff] %v39
  %s42 = scalar_lea.vmem %s1, 112
  %43 = vst [vmem:[%s42] sm:$0xff] %v39
  %s44 = scalar_lea.vmem %s0, 7
  %v45 = vld [vmem:[%s44] ss:$0 sm:$0xff]
  %s46 = scalar_lea.vmem %s1, 56
  %47 = vst [vmem:[%s46] sm:$0xff] %v45
  %s48 = scalar_lea.vmem %s1, 120
  %49 = vst [vmem:[%s48] sm:$0xff] %v45

// kernel: tile.19
$region0: #{tile.19}
  %s0 = inlined_call_operand.vmem [shape: f32[2,8,8,8], index: 0, kind: input, shape index: {}]
  %s1 = inlined_call_operand.vmem [shape: f32[16,64], index: 1, kind: output, shape index: {}]
  %v2 = vld [vmem:[%s0] ss:$8 sm:$0xf]
  %v3 = vld [vmem:[%s0] ss:$8 sm:$0xf0]
  %vm4 = vcmask 1047556
  %v5 = vsel %vm4, %v3, %v2
  %vm6 = vcmask 64512
  %7 = vst.msk [vmem:[%s1] sm:$0xff] %vm6, %v5
  %s8 = scalar_lea.vmem %s0, 64
  %v9 = vld [vmem:[%s8] ss:$8 sm:$0xf]
  %s10 = scalar_lea.vmem %s0, 64
  %v11 = vld [vmem:[%s10] ss:$8 sm:$0xf0]
  %vm12 = vcmask 1047556
  %v13 = vsel %vm12, %v11, %v9
  %vm14 = vcmask 64512
  %s15 = scalar_lea.vmem %s1, 8
  %16 = vst.msk [vmem:[%s15] sm:$0xff] %vm14, %v13
  %s17 = scalar_lea.vmem %s0, 7
  %v18 = vld [vmem:[%s17] ss:$8 sm:$0xf]
  %s19 = scalar_lea.vmem %s0, 7
  %v20 = vld [vmem:[%s19] ss:$8 sm:$0xf0]
  %vm21 = vcmask 1047556
  %v22 = vsel %vm21, %v20, %v18
  %23 = vrot.lane.b32.xlu0 %v22, 56
  %v24 = vpop.permute.xlu0 %23
  %vm25 = vcmask 523712
  %26 = vst.msk [vmem:[%s1] sm:$0xff] %vm25, %v24
  %s27 = scalar_lea.vmem %s0, 71
  %v28 = vld [vmem:[%s27] ss:$8 sm:$0xf]
  %s29 = scalar_lea.vmem %s0, 71
  %v30 = vld [vmem:[%s29] ss:$8 sm:$0xf0]
  %vm31 = vcmask 1047556
  %v32 = vsel %vm31, %v30, %v28
  %33 = vrot.lane.b32.xlu0 %v32, 56
  %v34 = vpop.permute.xlu0 %33
  %vm35 = vcmask 523712
  %s36 = scalar_lea.vmem %s1, 8
  %37 = vst.msk [vmem:[%s36] sm:$0xff] %vm35, %v34
  %s38 = scalar_lea.vmem %s0, 6
  %v39 = vld [vmem:[%s38] ss:$8 sm:$0xf]
  %s40 = scalar_lea.vmem %s0, 6
  %v41 = vld [vmem:[%s40] ss:$8 sm:$0xf0]
  %vm42 = vcmask 1047556
  %v43 = vsel %vm42, %v41, %v39
  %44 = vrot.lane.b32.xlu0 %v43, 48
  %v45 = vpop.permute.xlu0 %44
  %vm46 = vcmask 458112
  %47 = vst.msk [vmem:[%s1] sm:$0xff] %vm46, %v45
  %s48 = scalar_lea.vmem %s0, 70
  %v49 = vld [vmem:[%s48] ss:$8 sm:$0xf]
  %s50 = scalar_lea.vmem %s0, 70
  %v51 = vld [vmem:[%s50] ss:$8 sm:$0xf0]
  %vm52 = vcmask 1047556
  %v53 = vsel %vm52, %v51, %v49
  %54 = vrot.lane.b32.xlu0 %v53, 48
  %v55 = vpop.permute.xlu0 %54
  %vm56 = vcmask 458112
  %s57 = scalar_lea.vmem %s1, 8
  %58 = vst.msk [vmem:[%s57] sm:$0xff] %vm56, %v55
  %s59 = scalar_lea.vmem %s0, 5
  %v60 = vld [vmem:[%s59] ss:$8 sm:$0xf]
  %s61 = scalar_lea.vmem %s0, 5
  %v62 = vld [vmem:[%s61] ss:$8 sm:$0xf0]
  %vm63 = vcmask 1047556
  %v64 = vsel %vm63, %v62, %v60
  %65 = vrot.lane.b32.xlu0 %v64, 40
  %v66 = vpop.permute.xlu0 %65
  %vm67 = vcmask 392512
  %68 = vst.msk [vmem:[%s1] sm:$0xff] %vm67, %v66
  %s69 = scalar_lea.vmem %s0, 69
  %v70 = vld [vmem:[%s69] ss:$8 sm:$0xf]
  %s71 = scalar_lea.vmem %s0, 69
  %v72 = vld [vmem:[%s71] ss:$8 sm:$0xf0]
  %vm73 = vcmask 1047556
  %v74 = vsel %vm73, %v72, %v70
  %75 = vrot.lane.b32.xlu0 %v74, 40
  %v76 = vpop.permute.xlu0 %75
  %vm77 = vcmask 392512
  %s78 = scalar_lea.vmem %s1, 8
  %79 = vst.msk [vmem:[%s78] sm:$0xff] %vm77, %v76
  %s80 = scalar_lea.vmem %s0, 4
  %v81 = vld [vmem:[%s80] ss:$8 sm:$0xf]
  %s82 = scalar_lea.vmem %s0, 4
  %v83 = vld [vmem:[%s82] ss:$8 sm:$0xf0]
  %vm84 = vcmask 1047556
  %v85 = vsel %vm84, %v83, %v81
  %86 = vrot.lane.b32.xlu0 %v85, 32
  %v87 = vpop.permute.xlu0 %86
  %vm88 = vcmask 326912
  %89 = vst.msk [vmem:[%s1] sm:$0xff] %vm88, %v87
  %s90 = scalar_lea.vmem %s0, 68
  %v91 = vld [vmem:[%s90] ss:$8 sm:$0xf]
  %s92 = scalar_lea.vmem %s0, 68
  %v93 = vld [vmem:[%s92] ss:$8 sm:$0xf0]
  %vm94 = vcmask 1047556
  %v95 = vsel %vm94, %v93, %v91
  %96 = vrot.lane.b32.xlu0 %v95, 32
  %v97 = vpop.permute.xlu0 %96
  %vm98 = vcmask 326912
  %s99 = scalar_lea.vmem %s1, 8
  %100 = vst.msk [vmem:[%s99] sm:$0xff] %vm98, %v97
  %s101 = scalar_lea.vmem %s0, 3
  %v102 = vld [vmem:[%s101] ss:$8 sm:$0xf]
  %s103 = scalar_lea.vmem %s0, 3
  %v104 = vld [vmem:[%s103] ss:$8 sm:$0xf0]
  %vm105 = vcmask 1047556
  %v106 = vsel %vm105, %v104, %v102
  %107 = vrot.lane.b32.xlu0 %v106, 24
  %v108 = vpop.permute.xlu0 %107
  %vm109 = vcmask 261312
  %110 = vst.msk [vmem:[%s1] sm:$0xff] %vm109, %v108
  %s111 = scalar_lea.vmem %s0, 67
  %v112 = vld [vmem:[%s111] ss:$8 sm:$0xf]
  %s113 = scalar_lea.vmem %s0, 67
  %v114 = vld [vmem:[%s113] ss:$8 sm:$0xf0]
  %vm115 = vcmask 1047556
  %v116 = vsel %vm115, %v114, %v112
  %117 = vrot.lane.b32.xlu0 %v116, 24
  %v118 = vpop.permute.xlu0 %117
  %vm119 = vcmask 261312
  %s120 = scalar_lea.vmem %s1, 8
  %121 = vst.msk [vmem:[%s120] sm:$0xff] %vm119, %v118
  %s122 = scalar_lea.vmem %s0, 2
  %v123 = vld [vmem:[%s122] ss:$8 sm:$0xf]
  %s124 = scalar_lea.vmem %s0, 2
  %v125 = vld [vmem:[%s124] ss:$8 sm:$0xf0]
  %vm126 = vcmask 1047556
  %v127 = vsel %vm126, %v125, %v123
  %128 = vrot.lane.b32.xlu0 %v127, 16
  %v129 = vpop.permute.xlu0 %128
  %vm130 = vcmask 195712
  %131 = vst.msk [vmem:[%s1] sm:$0xff] %vm130, %v129
  %s132 = scalar_lea.vmem %s0, 66
  %v133 = vld [vmem:[%s132] ss:$8 sm:$0xf]
  %s134 = scalar_lea.vmem %s0, 66
  %v135 = vld [vmem:[%s134] ss:$8 sm:$0xf0]
  %vm136 = vcmask 1047556
  %v137 = vsel %vm136, %v135, %v133
  %138 = vrot.lane.b32.xlu0 %v137, 16
  %v139 = vpop.permute.xlu0 %138
  %vm140 = vcmask 195712
  %s141 = scalar_lea.vmem %s1, 8
  %142 = vst.msk [vmem:[%s141] sm:$0xff] %vm140, %v139
  %s143 = scalar_lea.vmem %s0, 1
  %v144 = vld [vmem:[%s143] ss:$8 sm:$0xf]
  %s145 = scalar_lea.vmem %s0, 1
  %v146 = vld [vmem:[%s145] ss:$8 sm:$0xf0]
  %vm147 = vcmask 1047556
  %v148 = vsel %vm147, %v146, %v144
  %149 = vrot.lane.b32.xlu0 %v148, 8
  %v150 = vpop.permute.xlu0 %149
  %vm151 = vcmask 130112
  %152 = vst.msk [vmem:[%s1] sm:$0xff] %vm151, %v150
  %s153 = scalar_lea.vmem %s0, 65
  %v154 = vld [vmem:[%s153] ss:$8 sm:$0xf]
  %s155 = scalar_lea.vmem %s0, 65
  %v156 = vld [vmem:[%s155] ss:$8 sm:$0xf0]
  %vm157 = vcmask 1047556
  %v158 = vsel %vm157, %v156, %v154
  %159 = vrot.lane.b32.xlu0 %v158, 8
  %v160 = vpop.permute.xlu0 %159
  %vm161 = vcmask 130112
  %s162 = scalar_lea.vmem %s1, 8
  %163 = vst.msk [vmem:[%s162] sm:$0xff] %vm161, %v160

// kernel: transformer_forward.1
$region0: #{transformer_forward.1}
  #allocation0 [shape = 'u32[]', space=smem, size = 0x4, offset = 0x4, fixed_abs, tag = 'smem constant byte address 0x4 - core index']
  #allocation1 [shape = 'u32[144,128]{1,0:T(1,128)}', space=vmem, size = 0x12000, scoped, tag = 'internal scratch']
  #allocation2 [shape = 'f32[16,32]{1,0:T(8,128)}', space=vmem, size = 0x2000, scoped, tag = 'scratch operand']
  #allocation3 [shape = 'f32[16,32]{1,0:T(8,128)}', space=vmem, size = 0x2000, scoped, tag = 'scratch operand']
  %s0 = inlined_call_operand.vmem [shape: f32[16,32], index: 0, kind: input, shape index: {}]
  %s1 = inlined_call_operand.vmem [shape: f32[16,64], index: 1, kind: input, shape index: {}]
  %s2 = inlined_call_operand.vmem [shape: f32[16,64], index: 2, kind: input, shape index: {}]
  %s3 = inlined_call_operand.vmem [shape: f32[16,64], index: 3, kind: input, shape index: {}]
  %s4 = inlined_call_operand.vmem [shape: f32[16,16], index: 4, kind: input, shape index: {}]
  %s5 = inlined_call_operand.vmem [shape: f32[2,1,32], index: 5, kind: input, shape index: {}]
  %s6 = inlined_call_operand.vmem [shape: bf16[2,32,96], index: 6, kind: input, shape index: {}]
  %s7 = inlined_call_operand.vmem [shape: bf16[2,32,32], index: 7, kind: input, shape index: {}]
  %s8 = inlined_call_operand.vmem [shape: f32[2,1,32], index: 8, kind: input, shape index: {}]
  %s9 = inlined_call_operand.vmem [shape: bf16[2,32,128], index: 9, kind: input, shape index: {}]
  %s10 = inlined_call_operand.vmem [shape: bf16[2,64,32], index: 10, kind: input, shape index: {}]
  %s11 = inlined_call_operand.vmem [shape: f32[1,32], index: 11, kind: input, shape index: {}]
  %s12 = inlined_call_operand.vmem [shape: bf16[32,64], index: 12, kind: input, shape index: {}]
  %s13 = inlined_call_operand.vmem [shape: f32[16,64], index: 13, kind: output, shape index: {}]
  %s14 = sld [smem:[#allocation0]]
  $region93: #{transformer_forward.1} parent=0
    _
  %s16 = ssub.s32 1, %s14
  %s17 = scalar_select 0, %s16, %s14
  loop: start=0, step=1, limit=4
  $region2: #{transformer_forward.1} parent=0 // loop_pre_header
    _
  $region3: #{transformer_forward.1} parent=0 // loop_header
    %s19 = sphi 0, %s23
    %p20 = scmp.ge.s32.totalorder %s19, 4
    %s27 = sphi 0, %s27
    %s29 = sphi 0, %s27
    %s30 = sphi 0, %s29
    %s44 = sphi 0, %s30
    %s48 = sphi 0, %s48
    %s50 = sphi 0, %s48
    %s51 = sphi 0, %s50
    %s65 = sphi 0, %s51
    %s69 = sphi 0, %s69
    %s71 = sphi 0, %s69
    %s72 = sphi 0, %s71
    %s86 = sphi 0, %s72
    %s90 = sphi 0, %s90
    %s92 = sphi 0, %s90
    %s93 = sphi 0, %s92
    %s107 = sphi 0, %s93
    %s111 = sphi 0, %s111
    %s113 = sphi 0, %s111
    %s114 = sphi 0, %s113
    %s128 = sphi 0, %s114
    %s134 = sphi 0, %s136
    %s137 = sphi 0, %s134
    %s138 = sphi 0, %s137
    %s154 = sphi 0, %s138
    %s160 = sphi 0, %s162
    %s163 = sphi 0, %s160
    %s164 = sphi 0, %s163
    %s180 = sphi 0, %s164
    %s186 = sphi 0, %s188
    %s189 = sphi 0, %s186
    %s190 = sphi 0, %s189
    %s206 = sphi 0, %s190
    %s212 = sphi 0, %s214
    %s215 = sphi 0, %s212
    %s216 = sphi 0, %s215
    %s232 = sphi 0, %s216
    %s238 = sphi 0, %s240
    %s241 = sphi 0, %s238
    %s242 = sphi 0, %s241
    %s258 = sphi 0, %s242
    %s264 = sphi 0, %s266
    %s267 = sphi 0, %s264
    %s268 = sphi 0, %s267
    %s284 = sphi 0, %s268
    %s288 = sphi 0, %s288
    %s290 = sphi 0, %s288
    %s291 = sphi 0, %s290
    %s305 = sphi 0, %s291
    %s309 = sphi 0, %s309
    %s311 = sphi 0, %s309
    %s312 = sphi 0, %s311
    %s326 = sphi 0, %s312
    %s330 = sphi 0, %s330
    %s332 = sphi 0, %s330
    %s333 = sphi 0, %s332
    %s347 = sphi 0, %s333
  $region4: #{transformer_forward.1} parent=0 // loop_header_branch
    %22 = sbr.rel (%p20) target = $region8
  $region5: #{transformer_forward.1} parent=0 // loop_body
    %s24 = ssub.s32 %s19, 1
    %s25 = ssub.s32 %s19, 2
    %s26 = sadd.s32 %s19, 1
    %s28 = sadd.s32 %s27, 1
    %p31 = scmp.eq.s32.totalorder %s19, 1
    %p32 = scmp.ne.s32.totalorder %s27, %s29
    %p33 = scmp.eq.s32.totalorder %s19, 0
    %p34 = por %p32, %p33
    %p35 = scmp.ne.s32.totalorder %s27, %s29
    %p36 = scmp.eq.s32.totalorder %s24, 1
    %p37 = por %p35, %p36
    %p38 = scmp.ne.s32.totalorder %s29, %s30
    %p39 = scmp.eq.s32.totalorder %s24, 0
    %p40 = por %p38, %p39
    %p41 = scmp.ne.s32.totalorder %s29, %s30
    %p42 = scmp.eq.s32.totalorder %s25, 1
    %p43 = por %p41, %p42
    %p45 = scmp.ne.s32.totalorder %s30, %s44
    %p46 = scmp.eq.s32.totalorder %s25, 0
    %p47 = por %p45, %p46
    %s49 = sadd.s32 %s48, 1
    %p52 = scmp.eq.s32.totalorder %s19, 1
    %p53 = scmp.ne.s32.totalorder %s48, %s50
    %p54 = scmp.eq.s32.totalorder %s19, 0
    %p55 = por %p53, %p54
    %p56 = scmp.ne.s32.totalorder %s48, %s50
    %p57 = scmp.eq.s32.totalorder %s24, 1
    %p58 = por %p56, %p57
    %p59 = scmp.ne.s32.totalorder %s50, %s51
    %p60 = scmp.eq.s32.totalorder %s24, 0
    %p61 = por %p59, %p60
    %p62 = scmp.ne.s32.totalorder %s50, %s51
    %p63 = scmp.eq.s32.totalorder %s25, 1
    %p64 = por %p62, %p63
    %p66 = scmp.ne.s32.totalorder %s51, %s65
    %p67 = scmp.eq.s32.totalorder %s25, 0
    %p68 = por %p66, %p67
    %s70 = sadd.s32 %s69, 1
    %p73 = scmp.eq.s32.totalorder %s19, 1
    %p74 = scmp.ne.s32.totalorder %s69, %s71
    %p75 = scmp.eq.s32.totalorder %s19, 0
    %p76 = por %p74, %p75
    %p77 = scmp.ne.s32.totalorder %s69, %s71
    %p78 = scmp.eq.s32.totalorder %s24, 1
    %p79 = por %p77, %p78
    %p80 = scmp.ne.s32.totalorder %s71, %s72
    %p81 = scmp.eq.s32.totalorder %s24, 0
    %p82 = por %p80, %p81
    %p83 = scmp.ne.s32.totalorder %s71, %s72
    %p84 = scmp.eq.s32.totalorder %s25, 1
    %p85 = por %p83, %p84
    %p87 = scmp.ne.s32.totalorder %s72, %s86
    %p88 = scmp.eq.s32.totalorder %s25, 0
    %p89 = por %p87, %p88
    %s91 = sadd.s32 %s90, 1
    %p94 = scmp.eq.s32.totalorder %s19, 1
    %p95 = scmp.ne.s32.totalorder %s90, %s92
    %p96 = scmp.eq.s32.totalorder %s19, 0
    %p97 = por %p95, %p96
    %p98 = scmp.ne.s32.totalorder %s90, %s92
    %p99 = scmp.eq.s32.totalorder %s24, 1
    %p100 = por %p98, %p99
    %p101 = scmp.ne.s32.totalorder %s92, %s93
    %p102 = scmp.eq.s32.totalorder %s24, 0
    %p103 = por %p101, %p102
    %p104 = scmp.ne.s32.totalorder %s92, %s93
    %p105 = scmp.eq.s32.totalorder %s25, 1
    %p106 = por %p104, %p105
    %p108 = scmp.ne.s32.totalorder %s93, %s107
    %p109 = scmp.eq.s32.totalorder %s25, 0
    %p110 = por %p108, %p109
    %s112 = sadd.s32 %s111, 1
    %p115 = scmp.eq.s32.totalorder %s19, 1
    %p116 = scmp.ne.s32.totalorder %s111, %s113
    %p117 = scmp.eq.s32.totalorder %s19, 0
    %p118 = por %p116, %p117
    %p119 = scmp.ne.s32.totalorder %s111, %s113
    %p120 = scmp.eq.s32.totalorder %s24, 1
    %p121 = por %p119, %p120
    %p122 = scmp.ne.s32.totalorder %s113, %s114
    %p123 = scmp.eq.s32.totalorder %s24, 0
    %p124 = por %p122, %p123
    %p125 = scmp.ne.s32.totalorder %s113, %s114
    %p126 = scmp.eq.s32.totalorder %s25, 1
    %p127 = por %p125, %p126
    %p129 = scmp.ne.s32.totalorder %s114, %s128
    %p130 = scmp.eq.s32.totalorder %s25, 0
    %p131 = por %p129, %p130
    %s132 = ssub.s32 %s19, %s26
    %p133 = scmp.eq.s32.totalorder %s132, 0
    %s135 = sadd.s32 %s134, 1
    %s136 = scalar_select %p133, %s134, %s135
    %p139 = pneg %p133
    %p140 = scmp.eq.s32.totalorder %s19, 1
    %p141 = por %p139, %p140
    %p142 = scmp.ne.s32.totalorder %s134, %s137
    %p143 = scmp.eq.s32.totalorder %s19, 0
    %p144 = por %p142, %p143
    %p145 = scmp.ne.s32.totalorder %s134, %s137
    %p146 = scmp.eq.s32.totalorder %s24, 1
    %p147 = por %p145, %p146
    %p148 = scmp.ne.s32.totalorder %s137, %s138
    %p149 = scmp.eq.s32.totalorder %s24, 0
    %p150 = por %p148, %p149
    %p151 = scmp.ne.s32.totalorder %s137, %s138
    %p152 = scmp.eq.s32.totalorder %s25, 1
    %p153 = por %p151, %p152
    %p155 = scmp.ne.s32.totalorder %s138, %s154
    %p156 = scmp.eq.s32.totalorder %s25, 0
    %p157 = por %p155, %p156
    %s158 = ssub.s32 %s19, %s26
    %p159 = scmp.eq.s32.totalorder %s158, 0
    %s161 = sadd.s32 %s160, 1
    %s162 = scalar_select %p159, %s160, %s161
    %p165 = pneg %p159
    %p166 = scmp.eq.s32.totalorder %s19, 1
    %p167 = por %p165, %p166
    %p168 = scmp.ne.s32.totalorder %s160, %s163
    %p169 = scmp.eq.s32.totalorder %s19, 0
    %p170 = por %p168, %p169
    %p171 = scmp.ne.s32.totalorder %s160, %s163
    %p172 = scmp.eq.s32.totalorder %s24, 1
    %p173 = por %p171, %p172
    %p174 = scmp.ne.s32.totalorder %s163, %s164
    %p175 = scmp.eq.s32.totalorder %s24, 0
    %p176 = por %p174, %p175
    %p177 = scmp.ne.s32.totalorder %s163, %s164
    %p178 = scmp.eq.s32.totalorder %s25, 1
    %p179 = por %p177, %p178
    %p181 = scmp.ne.s32.totalorder %s164, %s180
    %p182 = scmp.eq.s32.totalorder %s25, 0
    %p183 = por %p181, %p182
    %s184 = ssub.s32 %s19, %s26
    %p185 = scmp.eq.s32.totalorder %s184, 0
    %s187 = sadd.s32 %s186, 1
    %s188 = scalar_select %p185, %s186, %s187
    %p191 = pneg %p185
    %p192 = scmp.eq.s32.totalorder %s19, 1
    %p193 = por %p191, %p192
    %p194 = scmp.ne.s32.totalorder %s186, %s189
    %p195 = scmp.eq.s32.totalorder %s19, 0
    %p196 = por %p194, %p195
    %p197 = scmp.ne.s32.totalorder %s186, %s189
    %p198 = scmp.eq.s32.totalorder %s24, 1
    %p199 = por %p197, %p198
    %p200 = scmp.ne.s32.totalorder %s189, %s190
    %p201 = scmp.eq.s32.totalorder %s24, 0
    %p202 = por %p200, %p201
    %p203 = scmp.ne.s32.totalorder %s189, %s190
    %p204 = scmp.eq.s32.totalorder %s25, 1
    %p205 = por %p203, %p204
    %p207 = scmp.ne.s32.totalorder %s190, %s206
    %p208 = scmp.eq.s32.totalorder %s25, 0
    %p209 = por %p207, %p208
    %s210 = ssub.s32 %s19, %s26
    %p211 = scmp.eq.s32.totalorder %s210, 0
    %s213 = sadd.s32 %s212, 1
    %s214 = scalar_select %p211, %s212, %s213
    %p217 = pneg %p211
    %p218 = scmp.eq.s32.totalorder %s19, 1
    %p219 = por %p217, %p218
    %p220 = scmp.ne.s32.totalorder %s212, %s215
    %p221 = scmp.eq.s32.totalorder %s19, 0
    %p222 = por %p220, %p221
    %p223 = scmp.ne.s32.totalorder %s212, %s215
    %p224 = scmp.eq.s32.totalorder %s24, 1
    %p225 = por %p223, %p224
    %p226 = scmp.ne.s32.totalorder %s215, %s216
    %p227 = scmp.eq.s32.totalorder %s24, 0
    %p228 = por %p226, %p227
    %p229 = scmp.ne.s32.totalorder %s215, %s216
    %p230 = scmp.eq.s32.totalorder %s25, 1
    %p231 = por %p229, %p230
    %p233 = scmp.ne.s32.totalorder %s216, %s232
    %p234 = scmp.eq.s32.totalorder %s25, 0
    %p235 = por %p233, %p234
    %s236 = ssub.s32 %s19, %s26
    %p237 = scmp.eq.s32.totalorder %s236, 0
    %s239 = sadd.s32 %s238, 1
    %s240 = scalar_select %p237, %s238, %s239
    %p243 = pneg %p237
    %p244 = scmp.eq.s32.totalorder %s19, 1
    %p245 = por %p243, %p244
    %p246 = scmp.ne.s32.totalorder %s238, %s241
    %p247 = scmp.eq.s32.totalorder %s19, 0
    %p248 = por %p246, %p247
    %p249 = scmp.ne.s32.totalorder %s238, %s241
    %p250 = scmp.eq.s32.totalorder %s24, 1
    %p251 = por %p249, %p250
    %p252 = scmp.ne.s32.totalorder %s241, %s242
    %p253 = scmp.eq.s32.totalorder %s24, 0
    %p254 = por %p252, %p253
    %p255 = scmp.ne.s32.totalorder %s241, %s242
    %p256 = scmp.eq.s32.totalorder %s25, 1
    %p257 = por %p255, %p256
    %p259 = scmp.ne.s32.totalorder %s242, %s258
    %p260 = scmp.eq.s32.totalorder %s25, 0
    %p261 = por %p259, %p260
    %s262 = ssub.s32 %s19, %s26
    %p263 = scmp.eq.s32.totalorder %s262, 0
    %s265 = sadd.s32 %s264, 1
    %s266 = scalar_select %p263, %s264, %s265
    %p269 = pneg %p263
    %p270 = scmp.eq.s32.totalorder %s19, 1
    %p271 = por %p269, %p270
    %p272 = scmp.ne.s32.totalorder %s264, %s267
    %p273 = scmp.eq.s32.totalorder %s19, 0
    %p274 = por %p272, %p273
    %p275 = scmp.ne.s32.totalorder %s264, %s267
    %p276 = scmp.eq.s32.totalorder %s24, 1
    %p277 = por %p275, %p276
    %p278 = scmp.ne.s32.totalorder %s267, %s268
    %p279 = scmp.eq.s32.totalorder %s24, 0
    %p280 = por %p278, %p279
    %p281 = scmp.ne.s32.totalorder %s267, %s268
    %p282 = scmp.eq.s32.totalorder %s25, 1
    %p283 = por %p281, %p282
    %p285 = scmp.ne.s32.totalorder %s268, %s284
    %p286 = scmp.eq.s32.totalorder %s25, 0
    %p287 = por %p285, %p286
    %s289 = sadd.s32 %s288, 1
    %p292 = scmp.eq.s32.totalorder %s19, 1
    %p293 = scmp.ne.s32.totalorder %s288, %s290
    %p294 = scmp.eq.s32.totalorder %s19, 0
    %p295 = por %p293, %p294
    %p296 = scmp.ne.s32.totalorder %s288, %s290
    %p297 = scmp.eq.s32.totalorder %s24, 1
    %p298 = por %p296, %p297
    %p299 = scmp.ne.s32.totalorder %s290, %s291
    %p300 = scmp.eq.s32.totalorder %s24, 0
    %p301 = por %p299, %p300
    %p302 = scmp.ne.s32.totalorder %s290, %s291
    %p303 = scmp.eq.s32.totalorder %s25, 1
    %p304 = por %p302, %p303
    %p306 = scmp.ne.s32.totalorder %s291, %s305
    %p307 = scmp.eq.s32.totalorder %s25, 0
    %p308 = por %p306, %p307
    %s310 = sadd.s32 %s309, 1
    %p313 = scmp.eq.s32.totalorder %s19, 1
    %p314 = scmp.ne.s32.totalorder %s309, %s311
    %p315 = scmp.eq.s32.totalorder %s19, 0
    %p316 = por %p314, %p315
    %p317 = scmp.ne.s32.totalorder %s309, %s311
    %p318 = scmp.eq.s32.totalorder %s24, 1
    %p319 = por %p317, %p318
    %p320 = scmp.ne.s32.totalorder %s311, %s312
    %p321 = scmp.eq.s32.totalorder %s24, 0
    %p322 = por %p320, %p321
    %p323 = scmp.ne.s32.totalorder %s311, %s312
    %p324 = scmp.eq.s32.totalorder %s25, 1
    %p325 = por %p323, %p324
    %p327 = scmp.ne.s32.totalorder %s312, %s326
    %p328 = scmp.eq.s32.totalorder %s25, 0
    %p329 = por %p327, %p328
    %s331 = sadd.s32 %s330, 1
    %p334 = scmp.eq.s32.totalorder %s19, 1
    %p335 = scmp.ne.s32.totalorder %s330, %s332
    %p336 = scmp.eq.s32.totalorder %s19, 0
    %p337 = por %p335, %p336
    %p338 = scmp.ne.s32.totalorder %s330, %s332
    %p339 = scmp.eq.s32.totalorder %s24, 1
    %p340 = por %p338, %p339
    %p341 = scmp.ne.s32.totalorder %s332, %s333
    %p342 = scmp.eq.s32.totalorder %s24, 0
    %p343 = por %p341, %p342
    %p344 = scmp.ne.s32.totalorder %s332, %s333
    %p345 = scmp.eq.s32.totalorder %s25, 1
    %p346 = por %p344, %p345
    %p348 = scmp.ne.s32.totalorder %s333, %s347
    %p349 = scmp.eq.s32.totalorder %s25, 0
    %p350 = por %p348, %p349
    %p351 = scmp.le.s32.totalorder 1, %s19
    %p352 = scmp.lt.s32.totalorder %s19, 3
    %p353 = pnand %p351, %p352
    %p354 = pneg %p353
    // Predicated region
    $region9: #{transformer_forward.1} parent=5 // pred_check
      _
    $region10: #{transformer_forward.1} parent=5 // pred_check_branch
      %356 = sbr.rel (%p353) target = $region12
    $region11: #{transformer_forward.1} parent=5 // pred_region
      %s357 = ssub.s32 %s19, 1
      // Predicated region
      $region13: #{transformer_forward.1} parent=11 // pred_check
        %p358 = pneg %p40
      $region14: #{transformer_forward.1} parent=11 // pred_check_branch
        %360 = sbr.rel (%p358) target = $region16
      $region15: #{transformer_forward.1} parent=11 // pred_region
        _
      $region16: #{transformer_forward.1} parent=11 // pred_fallthru
        _
      // Predicated region
      $region17: #{transformer_forward.1} parent=11 // pred_check
        %p361 = pneg %p61
      $region18: #{transformer_forward.1} parent=11 // pred_check_branch
        %363 = sbr.rel (%p361) target = $region20
      $region19: #{transformer_forward.1} parent=11 // pred_region
        _
      $region20: #{transformer_forward.1} parent=11 // pred_fallthru
        _
      // Predicated region
      $region21: #{transformer_forward.1} parent=11 // pred_check
        %p364 = pneg %p82
      $region22: #{transformer_forward.1} parent=11 // pred_check_branch
        %366 = sbr.rel (%p364) target = $region24
      $region23: #{transformer_forward.1} parent=11 // pred_region
        _
      $region24: #{transformer_forward.1} parent=11 // pred_fallthru
        _
      // Predicated region
      $region25: #{transformer_forward.1} parent=11 // pred_check
        %p367 = pneg %p103
      $region26: #{transformer_forward.1} parent=11 // pred_check_branch
        %369 = sbr.rel (%p367) target = $region28
      $region27: #{transformer_forward.1} parent=11 // pred_region
        _
      $region28: #{transformer_forward.1} parent=11 // pred_fallthru
        _
      // Predicated region
      $region29: #{transformer_forward.1} parent=11 // pred_check
        %p370 = pneg %p124
      $region30: #{transformer_forward.1} parent=11 // pred_check_branch
        %372 = sbr.rel (%p370) target = $region32
      $region31: #{transformer_forward.1} parent=11 // pred_region
        _
      $region32: #{transformer_forward.1} parent=11 // pred_fallthru
        _
      // Predicated region
      $region33: #{transformer_forward.1} parent=11 // pred_check
        %p373 = pneg %p301
      $region34: #{transformer_forward.1} parent=11 // pred_check_branch
        %375 = sbr.rel (%p373) target = $region36
      $region35: #{transformer_forward.1} parent=11 // pred_region
        _
      $region36: #{transformer_forward.1} parent=11 // pred_fallthru
        _
      // Predicated region
      $region37: #{transformer_forward.1} parent=11 // pred_check
        %p376 = pneg %p322
      $region38: #{transformer_forward.1} parent=11 // pred_check_branch
        %378 = sbr.rel (%p376) target = $region40
      $region39: #{transformer_forward.1} parent=11 // pred_region
        _
      $region40: #{transformer_forward.1} parent=11 // pred_fallthru
        _
    $region12: #{transformer_forward.1} parent=5 // pred_fallthru
      _
    %p379 = scmp.lt.s32.totalorder %s19, 2
    // Predicated region
    $region41: #{transformer_forward.1} parent=5 // pred_check
      %p380 = pneg %p379
    $region42: #{transformer_forward.1} parent=5 // pred_check_branch
      %382 = sbr.rel (%p380) target = $region44
    $region43: #{transformer_forward.1} parent=5 // pred_region
      // Predicated region
      $region45: #{transformer_forward.1} parent=43 // pred_check
        %p383 = pneg %p144
      $region46: #{transformer_forward.1} parent=43 // pred_check_branch
        %385 = sbr.rel (%p383) target = $region48
      $region47: #{transformer_forward.1} parent=43 // pred_region
        %p386 = scmp.lt.s32.totalorder %s19, 1
        %s387 = scalar_select %p386, %s19, 1
        %s388 = scalar_lea.vmem %s5, %s387
      $region48: #{transformer_forward.1} parent=43 // pred_fallthru
        _
      // Predicated region
      $region49: #{transformer_forward.1} parent=43 // pred_check
        %p389 = pneg %p170
      $region50: #{transformer_forward.1} parent=43 // pred_check_branch
        %391 = sbr.rel (%p389) target = $region52
      $region51: #{transformer_forward.1} parent=43 // pred_region
        %p392 = scmp.lt.s32.totalorder %s19, 1
        %s393 = scalar_select %p392, %s19, 1
        %s394 = smul.addr %s393, 4
        %s395 = smul.addr %s394, 4
        %s396 = scalar_lea.vmem %s6, %s395
      $region52: #{transformer_forward.1} parent=43 // pred_fallthru
        _
      // Predicated region
      $region53: #{transformer_forward.1} parent=43 // pred_check
        %p397 = pneg %p196
      $region54: #{transformer_forward.1} parent=43 // pred_check_branch
        %399 = sbr.rel (%p397) target = $region56
      $region55: #{transformer_forward.1} parent=43 // pred_region
        %p400 = scmp.lt.s32.totalorder %s19, 1
        %s401 = scalar_select %p400, %s19, 1
        %s402 = smul.addr %s401, 4
        %s403 = smul.addr %s402, 4
        %s404 = scalar_lea.vmem %s7, %s403
      $region56: #{transformer_forward.1} parent=43 // pred_fallthru
        _
      // Predicated region
      $region57: #{transformer_forward.1} parent=43 // pred_check
        %p405 = pneg %p222
      $region58: #{transformer_forward.1} parent=43 // pred_check_branch
        %407 = sbr.rel (%p405) target = $region60
      $region59: #{transformer_forward.1} parent=43 // pred_region
        %p408 = scmp.lt.s32.totalorder %s19, 1
        %s409 = scalar_select %p408, %s19, 1
        %s410 = scalar_lea.vmem %s8, %s409
      $region60: #{transformer_forward.1} parent=43 // pred_fallthru
        _
      // Predicated region
      $region61: #{transformer_forward.1} parent=43 // pred_check
        %p411 = pneg %p248
      $region62: #{transformer_forward.1} parent=43 // pred_check_branch
        %413 = sbr.rel (%p411) target = $region64
      $region63: #{transformer_forward.1} parent=43 // pred_region
        %p414 = scmp.lt.s32.totalorder %s19, 1
        %s415 = scalar_select %p414, %s19, 1
        %s416 = smul.addr %s415, 4
        %s417 = smul.addr %s416, 4
        %s418 = scalar_lea.vmem %s9, %s417
      $region64: #{transformer_forward.1} parent=43 // pred_fallthru
        _
      // Predicated region
      $region65: #{transformer_forward.1} parent=43 // pred_check
        %p419 = pneg %p274
      $region66: #{transformer_forward.1} parent=43 // pred_check_branch
        %421 = sbr.rel (%p419) target = $region68
      $region67: #{transformer_forward.1} parent=43 // pred_region
        %p422 = scmp.lt.s32.totalorder %s19, 1
        %s423 = scalar_select %p422, %s19, 1
        %s424 = smul.addr %s423, 8
        %s425 = smul.addr %s424, 4
        %s426 = scalar_lea.vmem %s10, %s425
      $region68: #{transformer_forward.1} parent=43 // pred_fallthru
        _
    $region44: #{transformer_forward.1} parent=5 // pred_fallthru
      _
    %p427 = scmp.le.s32.totalorder 1, %s19
    %p428 = scmp.lt.s32.totalorder %s19, 3
    %p429 = pnand %p427, %p428
    %p430 = pneg %p429
    // Predicated region
    $region69: #{transformer_forward.1} parent=5 // pred_check
      _
    $region70: #{transformer_forward.1} parent=5 // pred_check_branch
      %432 = sbr.rel (%p429) target = $region72
    $region71: #{transformer_forward.1} parent=5 // pred_region
      %s433 = ssub.s32 %s19, 1
      %p434 = pneg %p40
      %p435 = pneg %p37
      %p436 = pneg %p61
      %p437 = pneg %p58
      %p438 = pneg %p82
      %p439 = pneg %p79
      %p440 = pneg %p103
      %p441 = pneg %p100
      %p442 = pneg %p124
      %p443 = pneg %p121
      %p444 = scmp.lt.s32.totalorder %s24, 1
      %s445 = scalar_select %p444, %s24, 1
      %s446 = scalar_lea.vmem %s5, %s445
      %p447 = pneg %p150
      %p448 = pneg %p147
      %p449 = scmp.lt.s32.totalorder %s24, 1
      %s450 = scalar_select %p449, %s24, 1
      %s451 = smul.addr %s450, 4
      %s452 = smul.addr %s451, 4
      %s453 = scalar_lea.vmem %s6, %s452
      %p454 = pneg %p176
      %p455 = pneg %p173
      %p456 = scmp.lt.s32.totalorder %s24, 1
      %s457 = scalar_select %p456, %s24, 1
      %s458 = smul.addr %s457, 4
      %s459 = smul.addr %s458, 4
      %s460 = scalar_lea.vmem %s7, %s459
      %p461 = pneg %p202
      %p462 = pneg %p199
      %p463 = scmp.lt.s32.totalorder %s24, 1
      %s464 = scalar_select %p463, %s24, 1
      %s465 = scalar_lea.vmem %s8, %s464
      %p466 = pneg %p228
      %p467 = pneg %p225
      %p468 = scmp.lt.s32.totalorder %s24, 1
      %s469 = scalar_select %p468, %s24, 1
      %s470 = smul.addr %s469, 4
      %s471 = smul.addr %s470, 4
      %s472 = scalar_lea.vmem %s9, %s471
      %p473 = pneg %p254
      %p474 = pneg %p251
      %p475 = scmp.lt.s32.totalorder %s24, 1
      %s476 = scalar_select %p475, %s24, 1
      %s477 = smul.addr %s476, 8
      %s478 = smul.addr %s477, 4
      %s479 = scalar_lea.vmem %s10, %s478
      %p480 = pneg %p280
      %p481 = pneg %p277
      %p482 = pneg %p301
      %p483 = pneg %p298
      %p484 = pneg %p322
      %p485 = pneg %p319
      %p486 = pneg %p343
      %p487 = pneg %p340
      %p488 = scmp.lt.s32.totalorder %s24, 1
      %s489 = scalar_select %p488, %s24, 1
      %s490 = scalar_lea.vmem %s5, %s489
      %p491 = scmp.lt.s32.totalorder %s24, 1
      %s492 = scalar_select %p491, %s24, 1
      %s493 = smul.addr %s492, 4
      %s494 = smul.addr %s493, 4
      %s495 = scalar_lea.vmem %s6, %s494
      %p496 = scmp.lt.s32.totalorder %s24, 1
      %s497 = scalar_select %p496, %s24, 1
      %s498 = smul.addr %s497, 4
      %s499 = smul.addr %s498, 4
      %s500 = scalar_lea.vmem %s7, %s499
      %p501 = scmp.lt.s32.totalorder %s24, 1
      %s502 = scalar_select %p501, %s24, 1
      %s503 = scalar_lea.vmem %s8, %s502
      %p504 = scmp.lt.s32.totalorder %s24, 1
      %s505 = scalar_select %p504, %s24, 1
      %s506 = smul.addr %s505, 4
      %s507 = smul.addr %s506, 4
      %s508 = scalar_lea.vmem %s9, %s507
      %p509 = scmp.lt.s32.totalorder %s24, 1
      %s510 = scalar_select %p509, %s24, 1
      %s511 = smul.addr %s510, 8
      %s512 = smul.addr %s511, 4
      %s513 = scalar_lea.vmem %s10, %s512
      %p515 = scmp.eq.s32.totalorder %s24, 0
      // Predicated region
      $region73: #{transformer_forward.1} parent=71 // pred_check
        %p516 = pneg %p515
      $region74: #{transformer_forward.1} parent=71 // pred_check_branch
        %518 = sbr.rel (%p516) target = $region76
      $region75: #{transformer_forward.1} parent=71 // pred_region
        %v519 = vld [vmem:[%s0] sm:$0xff]
        %v520 = vld [vmem:[%s0 + $0x8] sm:$0xff]
        %vm521 = vcmask 261120
        %522 = vst.msk [vmem:[#allocation2] sm:$0xff] %vm521, %v519
        %523 = vst.msk [vmem:[#allocation2 + $0x8] sm:$0xff] %vm521, %v520
      $region76: #{transformer_forward.1} parent=71 // pred_fallthru
        _
      %v524 = vld [vmem:[#allocation2] sm:$0xff]
      %v525 = vld [vmem:[#allocation2 + $0x8] sm:$0xff]
      %v526 = vmul.f32 %v524, %v524
      %v527 = vmul.f32 %v525, %v525
      %vm528 = vcmask 261120
      %v529 = vsel %vm528, %v526, 0.0
      %530 = vadd.xlane.f32.xlu0 %v529
      %v531 = vpop.xlane.xlu0 %530
      %v532 = vsel %vm528, %v527, 0.0
      %533 = vadd.xlane.f32.xlu0 %v532
      %v534 = vpop.xlane.xlu0 %533
      %v535 = vrcp.pop 32.0
      %v536 = vmul.f32 %v531, %v535
      %v537 = vmul.f32 %v534, %v535
      %v538 = vadd.f32 %v536, 1e-05
      %v539 = vadd.f32 %v537, 1e-05
      %v540 = vrsqrt.pop %v538
      %v541 = vrsqrt.pop %v539
      %v542 = vmul.f32 %v524, %v540
      %v543 = vmul.f32 %v525, %v541
      %v544 = vld [vmem:[%s490] sm:$0x1]
      %v546 = vlaneseq
      %v547 = vshrl.u32 %v546, 7
      %v548 = vsub.s32 0, %v547
      %v549 = vrot.slane %v544, %v548
      %v551 = vmul.f32 %v542, %v549
      %v552 = vmul.f32 %v543, %v549
      %v553 = vpack.c.bf16 %v552, %v551
      %v554 = vld [vmem:[%s495] sm:$0xf]
      %v555 = vld [vmem:[%s495 + $0x4] sm:$0xf]
      %v556 = vld [vmem:[%s495 + $0x8] sm:$0xf]
      %v557 = vld [vmem:[%s495 + $0xc] sm:$0xf]
      %v562 = vunpack.c.l.b16 %v554
      %v563 = vunpack.c.l.b16 %v555
      %v564 = vunpack.c.l.b16 %v556
      %v565 = vunpack.c.l.b16 %v557
      %v566 = vpack.c.b16 %v563, %v562
      %v567 = vpack.c.b16 %v565, %v564
      %v571 = vsel %vm528, %v553, 0
      %573 = vmatprep.subr.bf16.mxu0 0
      %574 = vmatpush1.bf16.msra.mxu0 %v566
      %575 = vmatprep.subr.bf16.mxu0 0
      %576 = vmatpush1.bf16.msra.mxu0 %v567
      %577 = vmatprep.subr.bf16.mxu0 0
      %578 = vmatpush1.bf16.msra.mxu0 0
      %579 = vmatprep.subr.bf16.mxu0 0
      %580 = vmatpush1.bf16.msra.mxu0 0
      %581 = vmatprep.subr.bf16.mxu0 0
      %582 = vmatpush1.bf16.msra.mxu0 0
      %583 = vmatprep.subr.bf16.mxu0 0
      %584 = vmatpush1.bf16.msra.mxu0 0
      %585 = vmatprep.subr.bf16.mxu0 0
      %586 = vmatpush1.bf16.msra.mxu0 0
      %587 = vmatprep.subr.bf16.mxu0 0
      %588 = vmatpush1.bf16.msra.mxu0 0
      %589 = vmatprep.subr.bf16.mxu0 0
      %590 = vmatpush1.bf16.msra.mxu0 0
      %591 = vmatprep.subr.bf16.mxu0 0
      %592 = vmatpush1.bf16.msra.mxu0 0
      %593 = vmatprep.subr.bf16.mxu0 0
      %594 = vmatpush1.bf16.msra.mxu0 0
      %595 = vmatprep.subr.bf16.mxu0 0
      %596 = vmatpush1.bf16.msra.mxu0 0
      %597 = vmatprep.subr.bf16.mxu0 0
      %598 = vmatpush1.bf16.msra.mxu0 0
      %599 = vmatprep.subr.bf16.mxu0 0
      %600 = vmatpush1.bf16.msra.mxu0 0
      %601 = vmatprep.subr.bf16.mxu0 0
      %602 = vmatpush1.bf16.msra.mxu0 0
      %603 = vmatprep.subr.bf16.mxu0 0
      %604 = vmatpush1.bf16.msra.mxu0 0
      %605 = vmatprep.mubr.bf16.mxu0 0
      %606 = vmatmul.mubr.bf16.gmra.mrb[0].mxu0 %v571
      %v607 = vpop.f32.mrb[0].mxu0
      %v608 = vadd.f32 0.0, %v607
      %v609 = vpop.f32.mrb[0].mxu0
      %v610 = vpop.f32.mrb[0].mxu0
      %v611 = vadd.f32 0.0, %v610
      %v612 = vpop.f32.mrb[0].mxu0
      %613 = vdwg.mxu0
      %616 = vrot.lane.b32.xlu0 %v608, 124
      %v617 = vpop.permute.xlu0 %616
      %618 = vrot.lane.b32.xlu0 %v611, 124
      %v619 = vpop.permute.xlu0 %618
      %622 = vrot.lane.b32.xlu0 %v608, 60
      %v623 = vpop.permute.xlu0 %622
      %624 = vrot.lane.b32.xlu0 %v611, 60
      %v625 = vpop.permute.xlu0 %624
      %vm628 = vcmask 490496
      %v629 = vsel %vm628, %v617, %v623
      %v630 = vsel %vm628, %v619, %v625
      %631 = vrot.lane.b32.xlu0 %v608, 68
      %v632 = vpop.permute.xlu0 %631
      %633 = vrot.lane.b32.xlu0 %v611, 68
      %v634 = vpop.permute.xlu0 %633
      %637 = vrot.lane.b32.xlu0 %v608, 4
      %v638 = vpop.permute.xlu0 %637
      %639 = vrot.lane.b32.xlu0 %v611, 4
      %v640 = vpop.permute.xlu0 %639
      %vm643 = vcmask 31744
      %v644 = vsel %vm643, %v632, %v638
      %v645 = vsel %vm643, %v634, %v640
      %v646 = vld [vmem:[%s1] sm:$0xff]
      %v647 = vld [vmem:[%s1 + $0x8] sm:$0xff]
      %v648 = vmul.f32 %v608, %v646
      %v649 = vmul.f32 %v611, %v647
      %v650 = vld [vmem:[%s2] sm:$0xff]
      %v651 = vld [vmem:[%s2 + $0x8] sm:$0xff]
      %v652 = vmul.f32 %v629, %v650
      %v653 = vmul.f32 %v630, %v651
      %v654 = vadd.f32 %v648, %v652
      %v655 = vadd.f32 %v649, %v653
      %v656 = vld [vmem:[%s3] sm:$0xff]
      %v657 = vld [vmem:[%s3 + $0x8] sm:$0xff]
      %v658 = vmul.f32 %v644, %v656
      %v659 = vmul.f32 %v645, %v657
      %v660 = vadd.f32 %v654, %v658
      %v661 = vadd.f32 %v655, %v659
      %v662 = vpack.c.bf16 %v661, %v660
      %v663 = vpack.c.bf16 %v611, %v608
      %v664 = vld [vmem:[%s4] sm:$0xff]
      %v665 = vld [vmem:[%s4 + $0x8] sm:$0xff]
      %667 = vrot.lane.b32.xlu0 %v662, 96
      %v668 = vpop.permute.xlu0 %667
      %vm669 = vcmask 64512
      %v671 = vsel %vm669, %v662, 0
      %v674 = vsel %vm669, %v668, 0
      %676 = vmatprep.subr.bf16.mxu0 0
      %677 = vmatpush1.bf16.xpose.msra.mxu0 %v674
      %678 = vmatprep.subr.bf16.mxu0 0
      %679 = vmatpush1.bf16.xpose.msra.mxu0 0
      %680 = vmatprep.subr.bf16.mxu0 0
      %681 = vmatpush1.bf16.xpose.msra.mxu0 0
      %682 = vmatprep.subr.bf16.mxu0 0
      %683 = vmatpush1.bf16.xpose.msra.mxu0 0
      %684 = vmatprep.subr.bf16.mxu0 0
      %685 = vmatpush1.bf16.xpose.msra.mxu0 0
      %686 = vmatprep.subr.bf16.mxu0 0
      %687 = vmatpush1.bf16.xpose.msra.mxu0 0
      %688 = vmatprep.subr.bf16.mxu0 0
      %689 = vmatpush1.bf16.xpose.msra.mxu0 0
      %690 = vmatprep.subr.bf16.mxu0 0
      %691 = vmatpush1.bf16.xpose.msra.mxu0 0
      %692 = vmatprep.subr.bf16.mxu0 0
      %693 = vmatpush1.bf16.xpose.msra.mxu0 0
      %694 = vmatprep.subr.bf16.mxu0 0
      %695 = vmatpush1.bf16.xpose.msra.mxu0 0
      %696 = vmatprep.subr.bf16.mxu0 0
      %697 = vmatpush1.bf16.xpose.msra.mxu0 0
      %698 = vmatprep.subr.bf16.mxu0 0
      %699 = vmatpush1.bf16.xpose.msra.mxu0 0
      %700 = vmatprep.subr.bf16.mxu0 0
      %701 = vmatpush1.bf16.xpose.msra.mxu0 0
      %702 = vmatprep.subr.bf16.mxu0 0
      %703 = vmatpush1.bf16.xpose.msra.mxu0 0
      %704 = vmatprep.subr.bf16.mxu0 0
      %705 = vmatpush1.bf16.xpose.msra.mxu0 0
      %706 = vmatprep.subr.bf16.mxu0 0
      %707 = vmatpush1.bf16.xpose.msra.mxu0 0
      %708 = vmatprep.mubr.bf16.mxu0 0
      %709 = vmatmul.mubr.bf16.gmra.mrb[0].mxu0 %v671
      %v710 = vpop.f32.mrb[0].mxu0
      %v711 = vadd.f32 0.0, %v710
      %v712 = vpop.f32.mrb[0].mxu0
      %v713 = vpop.f32.mrb[0].mxu0
      %v714 = vadd.f32 0.0, %v713
      %v715 = vpop.f32.mrb[0].mxu0
      %716 = vdwg.mxu0
      %v717 = vmul.f32 %v711, 0.35355338
      %v718 = vmul.f32 %v714, 0.35355338
      %v719 = vadd.f32 %v717, %v664
      %v720 = vadd.f32 %v718, %v665
      %vm721 = vcmask 130048
      %v722 = vsel %vm721, %v719, -inf
      %723 = vmax.xlane.f32.xlu0 %v722
      %v724 = vpop.xlane.xlu0 %723
      %v725 = vsel %vm721, %v720, -inf
      %726 = vmax.xlane.f32.xlu0 %v725
      %v727 = vpop.xlane.xlu0 %726
      %v728 = vsub.f32 %v719, %v724
      %v729 = vsub.f32 %v720, %v727
      %v730 = vmul.f32 %v728, 1.442695
      %v731 = vpow.pop %v730
      %v732 = vmul.f32 %v729, 1.442695
      %v733 = vpow.pop %v732
      %v734 = vsel %vm721, %v731, 0.0
      %735 = vadd.xlane.f32.xlu0 %v734
      %v736 = vpop.xlane.xlu0 %735
      %v737 = vsel %vm721, %v733, 0.0
      %738 = vadd.xlane.f32.xlu0 %v737
      %v739 = vpop.xlane.xlu0 %738
      %v740 = vrcp.pop %v736
      %v741 = vrcp.pop %v739
      %v742 = vmul.f32 %v731, %v740
      %v743 = vmul.f32 %v733, %v741
      %v744 = vpack.c.bf16 %v743, %v742
      %746 = vrot.lane.b32.xlu0 %v663, 64
      %v747 = vpop.permute.xlu0 %746
      %v750 = vsel %vm721, %v744, 0
      %752 = vmatprep.subr.bf16.mxu0 0
      %753 = vmatpush1.bf16.msra.mxu0 %v747
      %754 = vmatprep.subr.bf16.mxu0 0
      %755 = vmatpush1.bf16.msra.mxu0 0
      %756 = vmatprep.subr.bf16.mxu0 0
      %757 = vmatpush1.bf16.msra.mxu0 0
      %758 = vmatprep.subr.bf16.mxu0 0
      %759 = vmatpush1.bf16.msra.mxu0 0
      %760 = vmatprep.subr.bf16.mxu0 0
      %761 = vmatpush1.bf16.msra.mxu0 0
      %762 = vmatprep.subr.bf16.mxu0 0
      %763 = vmatpush1.bf16.msra.mxu0 0
      %764 = vmatprep.subr.bf16.mxu0 0
      %765 = vmatpush1.bf16.msra.mxu0 0
      %766 = vmatprep.subr.bf16.mxu0 0
      %767 = vmatpush1.bf16.msra.mxu0 0
      %768 = vmatprep.subr.bf16.mxu0 0
      %769 = vmatpush1.bf16.msra.mxu0 0
      %770 = vmatprep.subr.bf16.mxu0 0
      %771 = vmatpush1.bf16.msra.mxu0 0
      %772 = vmatprep.subr.bf16.mxu0 0
      %773 = vmatpush1.bf16.msra.mxu0 0
      %774 = vmatprep.subr.bf16.mxu0 0
      %775 = vmatpush1.bf16.msra.mxu0 0
      %776 = vmatprep.subr.bf16.mxu0 0
      %777 = vmatpush1.bf16.msra.mxu0 0
      %778 = vmatprep.subr.bf16.mxu0 0
      %779 = vmatpush1.bf16.msra.mxu0 0
      %780 = vmatprep.subr.bf16.mxu0 0
      %781 = vmatpush1.bf16.msra.mxu0 0
      %782 = vmatprep.subr.bf16.mxu0 0
      %783 = vmatpush1.bf16.msra.mxu0 0
      %784 = vmatprep.mubr.bf16.mxu0 0
      %785 = vmatmul.mubr.bf16.gmra.mrb[0].mxu0 %v750
      %v786 = vpop.f32.mrb[0].mxu0
      %v787 = vadd.f32 0.0, %v786
      %v788 = vpop.f32.mrb[0].mxu0
      %v789 = vpop.f32.mrb[0].mxu0
      %v790 = vadd.f32 0.0, %v789
      %v791 = vpop.f32.mrb[0].mxu0
      %792 = vdwg.mxu0
      %793 = vst.msk [vmem:[#allocation3] sm:$0xff] %vm669, %v787
      %794 = vst.msk [vmem:[#allocation3 + $0x8] sm:$0xff] %vm669, %v790
      %795 = vrot.lane.b32.xlu0 %v662, 120
      %v796 = vpop.permute.xlu0 %795
      %797 = vrot.lane.b32.xlu0 %v662, 88
      %v798 = vpop.permute.xlu0 %797
      %v800 = vsel %vm669, %v796, 0
      %v803 = vsel %vm669, %v798, 0
      %805 = vmatprep.subr.bf16.mxu0 0
      %806 = vmatpush1.bf16.xpose.msra.mxu0 %v803
      %807 = vmatprep.subr.bf16.mxu0 0
      %808 = vmatpush1.bf16.xpose.msra.mxu0 0
      %809 = vmatprep.subr.bf16.mxu0 0
      %810 = vmatpush1.bf16.xpose.msra.mxu0 0
      %811 = vmatprep.subr.bf16.mxu0 0
      %812 = vmatpush1.bf16.xpose.msra.mxu0 0
      %813 = vmatprep.subr.bf16.mxu0 0
      %814 = vmatpush1.bf16.xpose.msra.mxu0 0
      %815 = vmatprep.subr.bf16.mxu0 0
      %816 = vmatpush1.bf16.xpose.msra.mxu0 0
      %817 = vmatprep.subr.bf16.mxu0 0
      %818 = vmatpush1.bf16.xpose.msra.mxu0 0
      %819 = vmatprep.subr.bf16.mxu0 0
      %820 = vmatpush1.bf16.xpose.msra.mxu0 0
      %821 = vmatprep.subr.bf16.mxu0 0
      %822 = vmatpush1.bf16.xpose.msra.mxu0 0
      %823 = vmatprep.subr.bf16.mxu0 0
      %824 = vmatpush1.bf16.xpose.msra.mxu0 0
      %825 = vmatprep.subr.bf16.mxu0 0
      %826 = vmatpush1.bf16.xpose.msra.mxu0 0
      %827 = vmatprep.subr.bf16.mxu0 0
      %828 = vmatpush1.bf16.xpose.msra.mxu0 0
      %829 = vmatprep.subr.bf16.mxu0 0
      %830 = vmatpush1.bf16.xpose.msra.mxu0 0
      %831 = vmatprep.subr.bf16.mxu0 0
      %832 = vmatpush1.bf16.xpose.msra.mxu0 0
      %833 = vmatprep.subr.bf16.mxu0 0
      %834 = vmatpush1.bf16.xpose.msra.mxu0 0
      %835 = vmatprep.subr.bf16.mxu0 0
      %836 = vmatpush1.bf16.xpose.msra.mxu0 0
      %837 = vmatprep.mubr.bf16.mxu0 0
      %838 = vmatmul.mubr.bf16.gmra.mrb[0].mxu0 %v800
      %v839 = vpop.f32.mrb[0].mxu0
      %v840 = vadd.f32 0.0, %v839
      %v841 = vpop.f32.mrb[0].mxu0
      %v842 = vpop.f32.mrb[0].mxu0
      %v843 = vadd.f32 0.0, %v842
      %v844 = vpop.f32.mrb[0].mxu0
      %845 = vdwg.mxu0
      %v846 = vmul.f32 %v840, 0.35355338
      %v847 = vmul.f32 %v843, 0.35355338
      %v848 = vadd.f32 %v846, %v664
      %v849 = vadd.f32 %v847, %v665
      %v850 = vsel %vm721, %v848, -inf
      %851 = vmax.xlane.f32.xlu0 %v850
      %v852 = vpop.xlane.xlu0 %851
      %v853 = vsel %vm721, %v849, -inf
      %854 = vmax.xlane.f32.xlu0 %v853
      %v855 = vpop.xlane.xlu0 %854
      %v856 = vsub.f32 %v848, %v852
      %v857 = vsub.f32 %v849, %v855
      %v858 = vmul.f32 %v856, 1.442695
      %v859 = vpow.pop %v858
      %v860 = vmul.f32 %v857, 1.442695
      %v861 = vpow.pop %v860
      %v862 = vsel %vm721, %v859, 0.0
      %863 = vadd.xlane.f32.xlu0 %v862
      %v864 = vpop.xlane.xlu0 %863
      %v865 = vsel %vm721, %v861, 0.0
      %866 = vadd.xlane.f32.xlu0 %v865
      %v867 = vpop.xlane.xlu0 %866
      %v868 = vrcp.pop %v864
      %v869 = vrcp.pop %v867
      %v870 = vmul.f32 %v859, %v868
      %v871 = vmul.f32 %v861, %v869
      %v872 = vpack.c.bf16 %v871, %v870
      %873 = vrot.lane.b32.xlu0 %v663, 56
      %v874 = vpop.permute.xlu0 %873
      %v877 = vsel %vm721, %v872, 0
      %879 = vmatprep.subr.bf16.mxu0 0
      %880 = vmatpush1.bf16.msra.mxu0 %v874
      %881 = vmatprep.subr.bf16.mxu0 0
      %882 = vmatpush1.bf16.msra.mxu0 0
      %883 = vmatprep.subr.bf16.mxu0 0
      %884 = vmatpush1.bf16.msra.mxu0 0
      %885 = vmatprep.subr.bf16.mxu0 0
      %886 = vmatpush1.bf16.msra.mxu0 0
      %887 = vmatprep.subr.bf16.mxu0 0
      %888 = vmatpush1.bf16.msra.mxu0 0
      %889 = vmatprep.subr.bf16.mxu0 0
      %890 = vmatpush1.bf16.msra.mxu0 0
      %891 = vmatprep.subr.bf16.mxu0 0
      %892 = vmatpush1.bf16.msra.mxu0 0
      %893 = vmatprep.subr.bf16.mxu0 0
      %894 = vmatpush1.bf16.msra.mxu0 0
      %895 = vmatprep.subr.bf16.mxu0 0
      %896 = vmatpush1.bf16.msra.mxu0 0
      %897 = vmatprep.subr.bf16.mxu0 0
      %898 = vmatpush1.bf16.msra.mxu0 0
      %899 = vmatprep.subr.bf16.mxu0 0
      %900 = vmatpush1.bf16.msra.mxu0 0
      %901 = vmatprep.subr.bf16.mxu0 0
      %902 = vmatpush1.bf16.msra.mxu0 0
      %903 = vmatprep.subr.bf16.mxu0 0
      %904 = vmatpush1.bf16.msra.mxu0 0
      %905 = vmatprep.subr.bf16.mxu0 0
      %906 = vmatpush1.bf16.msra.mxu0 0
      %907 = vmatprep.subr.bf16.mxu0 0
      %908 = vmatpush1.bf16.msra.mxu0 0
      %909 = vmatprep.subr.bf16.mxu0 0
      %910 = vmatpush1.bf16.msra.mxu0 0
      %911 = vmatprep.mubr.bf16.mxu0 0
      %912 = vmatmul.mubr.bf16.gmra.mrb[0].mxu0 %v877
      %v913 = vpop.f32.mrb[0].mxu0
      %v914 = vadd.f32 0.0, %v913
      %v915 = vpop.f32.mrb[0].mxu0
      %v916 = vpop.f32.mrb[0].mxu0
      %v917 = vadd.f32 0.0, %v916
      %v918 = vpop.f32.mrb[0].mxu0
      %919 = vdwg.mxu0
      %922 = vrot.lane.b32.xlu0 %v914, 8
      %v923 = vpop.permute.xlu0 %922
      %924 = vrot.lane.b32.xlu0 %v917, 8
      %v925 = vpop.permute.xlu0 %924
      %vm928 = vcmask 130112
      %929 = vst.msk [vmem:[#allocation3] sm:$0xff] %vm928, %v923
      %930 = vst.msk [vmem:[#allocation3 + $0x8] sm:$0xff] %vm928, %v925
      %931 = vrot.lane.b32.xlu0 %v662, 112
      %v932 = vpop.permute.xlu0 %931
      %933 = vrot.lane.b32.xlu0 %v662, 80
      %v934 = vpop.permute.xlu0 %933
      %v936 = vsel %vm669, %v932, 0
      %v939 = vsel %vm669, %v934, 0
      %941 = vmatprep.subr.bf16.mxu0 0
      %942 = vmatpush1.bf16.xpose.msra.mxu0 %v939
      %943 = vmatprep.subr.bf16.mxu0 0
      %944 = vmatpush1.bf16.xpose.msra.mxu0 0
      %945 = vmatprep.subr.bf16.mxu0 0
      %946 = vmatpush1.bf16.xpose.msra.mxu0 0
      %947 = vmatprep.subr.bf16.mxu0 0
      %948 = vmatpush1.bf16.xpose.msra.mxu0 0
      %949 = vmatprep.subr.bf16.mxu0 0
      %950 = vmatpush1.bf16.xpose.msra.mxu0 0
      %951 = vmatprep.subr.bf16.mxu0 0
      %952 = vmatpush1.bf16.xpose.msra.mxu0 0
      %953 = vmatprep.subr.bf16.mxu0 0
      %954 = vmatpush1.bf16.xpose.msra.mxu0 0
      %955 = vmatprep.subr.bf16.mxu0 0
      %956 = vmatpush1.bf16.xpose.msra.mxu0 0
      %957 = vmatprep.subr.bf16.mxu0 0
      %958 = vmatpush1.bf16.xpose.msra.mxu0 0
      %959 = vmatprep.subr.bf16.mxu0 0
      %960 = vmatpush1.bf16.xpose.msra.mxu0 0
      %961 = vmatprep.subr.bf16.mxu0 0
      %962 = vmatpush1.bf16.xpose.msra.mxu0 0
      %963 = vmatprep.subr.bf16.mxu0 0
      %964 = vmatpush1.bf16.xpose.msra.mxu0 0
      %965 = vmatprep.subr.bf16.mxu0 0
      %966 = vmatpush1.bf16.xpose.msra.mxu0 0
      %967 = vmatprep.subr.bf16.mxu0 0
      %968 = vmatpush1.bf16.xpose.msra.mxu0 0
      %969 = vmatprep.subr.bf16.mxu0 0
      %970 = vmatpush1.bf16.xpose.msra.mxu0 0
      %971 = vmatprep.subr.bf16.mxu0 0
      %972 = vmatpush1.bf16.xpose.msra.mxu0 0
      %973 = vmatprep.mubr.bf16.mxu0 0
      %974 = vmatmul.mubr.bf16.gmra.mrb[0].mxu0 %v936
      %v975 = vpop.f32.mrb[0].mxu0
      %v976 = vadd.f32 0.0, %v975
      %v977 = vpop.f32.mrb[0].mxu0
      %v978 = vpop.f32.mrb[0].mxu0
      %v979 = vadd.f32 0.0, %v978
      %v980 = vpop.f32.mrb[0].mxu0
      %981 = vdwg.mxu0
      %v982 = vmul.f32 %v976, 0.35355338
      %v983 = vmul.f32 %v979, 0.35355338
      %v984 = vadd.f32 %v982, %v664
      %v985 = vadd.f32 %v983, %v665
      %v986 = vsel %vm721, %v984, -inf
      %987 = vmax.xlane.f32.xlu0 %v986
      %v988 = vpop.xlane.xlu0 %987
      %v989 = vsel %vm721, %v985, -inf
      %990 = vmax.xlane.f32.xlu0 %v989
      %v991 = vpop.xlane.xlu0 %990
      %v992 = vsub.f32 %v984, %v988
      %v993 = vsub.f32 %v985, %v991
      %v994 = vmul.f32 %v992, 1.442695
      %v995 = vpow.pop %v994
      %v996 = vmul.f32 %v993, 1.442695
      %v997 = vpow.pop %v996
      %v998 = vsel %vm721, %v995, 0.0
      %999 = vadd.xlane.f32.xlu0 %v998
      %v1000 = vpop.xlane.xlu0 %999
      %v1001 = vsel %vm721, %v997, 0.0
      %1002 = vadd.xlane.f32.xlu0 %v1001
      %v1003 = vpop.xlane.xlu0 %1002
      %v1004 = vrcp.pop %v1000
      %v1005 = vrcp.pop %v1003
      %v1006 = vmul.f32 %v995, %v1004
      %v1007 = vmul.f32 %v997, %v1005
      %v1008 = vpack.c.bf16 %v1007, %v1006
      %1009 = vrot.lane.b32.xlu0 %v663, 48
      %v1010 = vpop.permute.xlu0 %1009
      %v1013 = vsel %vm721, %v1008, 0
      %1015 = vmatprep.subr.bf16.mxu0 0
      %1016 = vmatpush1.bf16.msra.mxu0 %v1010
      %1017 = vmatprep.subr.bf16.mxu0 0
      %1018 = vmatpush1.bf16.msra.mxu0 0
      %1019 = vmatprep.subr.bf16.mxu0 0
      %1020 = vmatpush1.bf16.msra.mxu0 0
      %1021 = vmatprep.subr.bf16.mxu0 0
      %1022 = vmatpush1.bf16.msra.mxu0 0
      %1023 = vmatprep.subr.bf16.mxu0 0
      %1024 = vmatpush1.bf16.msra.mxu0 0
      %1025 = vmatprep.subr.bf16.mxu0 0
      %1026 = vmatpush1.bf16.msra.mxu0 0
      %1027 = vmatprep.subr.bf16.mxu0 0
      %1028 = vmatpush1.bf16.msra.mxu0 0
      %1029 = vmatprep.subr.bf16.mxu0 0
      %1030 = vmatpush1.bf16.msra.mxu0 0
      %1031 = vmatprep.subr.bf16.mxu0 0
      %1032 = vmatpush1.bf16.msra.mxu0 0
      %1033 = vmatprep.subr.bf16.mxu0 0
      %1034 = vmatpush1.bf16.msra.mxu0 0
      %1035 = vmatprep.subr.bf16.mxu0 0
      %1036 = vmatpush1.bf16.msra.mxu0 0
      %1037 = vmatprep.subr.bf16.mxu0 0
      %1038 = vmatpush1.bf16.msra.mxu0 0
      %1039 = vmatprep.subr.bf16.mxu0 0
      %1040 = vmatpush1.bf16.msra.mxu0 0
      %1041 = vmatprep.subr.bf16.mxu0 0
      %1042 = vmatpush1.bf16.msra.mxu0 0
      %1043 = vmatprep.subr.bf16.mxu0 0
      %1044 = vmatpush1.bf16.msra.mxu0 0
      %1045 = vmatprep.subr.bf16.mxu0 0
      %1046 = vmatpush1.bf16.msra.mxu0 0
      %1047 = vmatprep.mubr.bf16.mxu0 0
      %1048 = vmatmul.mubr.bf16.gmra.mrb[0].mxu0 %v1013
      %v1049 = vpop.f32.mrb[0].mxu0
      %v1050 = vadd.f32 0.0, %v1049
      %v1051 = vpop.f32.mrb[0].mxu0
      %v1052 = vpop.f32.mrb[0].mxu0
      %v1053 = vadd.f32 0.0, %v1052
      %v1054 = vpop.f32.mrb[0].mxu0
      %1055 = vdwg.mxu0
      %1058 = vrot.lane.b32.xlu0 %v1050, 16
      %v1059 = vpop.permute.xlu0 %1058
      %1060 = vrot.lane.b32.xlu0 %v1053, 16
      %v1061 = vpop.permute.xlu0 %1060
      %vm1064 = vcmask 195712
      %1065 = vst.msk [vmem:[#allocation3] sm:$0xff] %vm1064, %v1059
      %1066 = vst.msk [vmem:[#allocation3 + $0x8] sm:$0xff] %vm1064, %v1061
      %1067 = vrot.lane.b32.xlu0 %v662, 104
      %v1068 = vpop.permute.xlu0 %1067
      %1069 = vrot.lane.b32.xlu0 %v662, 72
      %v1070 = vpop.permute.xlu0 %1069
      %v1072 = vsel %vm669, %v1068, 0
      %v1075 = vsel %vm669, %v1070, 0
      %1077 = vmatprep.subr.bf16.mxu0 0
      %1078 = vmatpush1.bf16.xpose.msra.mxu0 %v1075
      %1079 = vmatprep.subr.bf16.mxu0 0
      %1080 = vmatpush1.bf16.xpose.msra.mxu0 0
      %1081 = vmatprep.subr.bf16.mxu0 0
      %1082 = vmatpush1.bf16.xpose.msra.mxu0 0
      %1083 = vmatprep.subr.bf16.mxu0 0
      %1084 = vmatpush1.bf16.xpose.msra.mxu0 0
      %1085 = vmatprep.subr.bf16.mxu0 0
      %1086 = vmatpush1.bf16.xpose.msra.mxu0 0
      %1087 = vmatprep.subr.bf16.mxu0 0
      %1088 = vmatpush1.bf16.xpose.msra.mxu0 0
      %1089 = vmatprep.subr.bf16.mxu0 0
      %1090 = vmatpush1.bf16.xpose.msra.mxu0 0
      %1091 = vmatprep.subr.bf16.mxu0 0
      %1092 = vmatpush1.bf16.xpose.msra.mxu0 0
      %1093 = vmatprep.subr.bf16.mxu0 0
      %1094 = vmatpush1.bf16.xpose.msra.mxu0 0
      %1095 = vmatprep.subr.bf16.mxu0 0
      %1096 = vmatpush1.bf16.xpose.msra.mxu0 0
      %1097 = vmatprep.subr.bf16.mxu0 0
      %1098 = vmatpush1.bf16.xpose.msra.mxu0 0
      %1099 = vmatprep.subr.bf16.mxu0 0
      %1100 = vmatpush1.bf16.xpose.msra.mxu0 0
      %1101 = vmatprep.subr.bf16.mxu0 0
      %1102 = vmatpush1.bf16.xpose.msra.mxu0 0
      %1103 = vmatprep.subr.bf16.mxu0 0
      %1104 = vmatpush1.bf16.xpose.msra.mxu0 0
      %1105 = vmatprep.subr.bf16.mxu0 0
      %1106 = vmatpush1.bf16.xpose.msra.mxu0 0
      %1107 = vmatprep.subr.bf16.mxu0 0
      %1108 = vmatpush1.bf16.xpose.msra.mxu0 0
      %1109 = vmatprep.mubr.bf16.mxu0 0
      %1110 = vmatmul.mubr.bf16.gmra.mrb[0].mxu0 %v1072
      %v1111 = vpop.f32.mrb[0].mxu0
      %v1112 = vadd.f32 0.0, %v1111
      %v1113 = vpop.f32.mrb[0].mxu0
      %v1114 = vpop.f32.mrb[0].mxu0
      %v1115 = vadd.f32 0.0, %v1114
      %v1116 = vpop.f32.mrb[0].mxu0
      %1117 = vdwg.mxu0
      %v1118 = vmul.f32 %v1112, 0.35355338
      %v1119 = vmul.f32 %v1115, 0.35355338
      %v1120 = vadd.f32 %v1118, %v664
      %v1121 = vadd.f32 %v1119, %v665
      %v1122 = vsel %vm721, %v1120, -inf
      %1123 = vmax.xlane.f32.xlu0 %v1122
      %v1124 = vpop.xlane.xlu0 %1123
      %v1125 = vsel %vm721, %v1121, -inf
      %1126 = vmax.xlane.f32.xlu0 %v1125
      %v1127 = vpop.xlane.xlu0 %1126
      %v1128 = vsub.f32 %v1120, %v1124
      %v1129 = vsub.f32 %v1121, %v1127
      %v1130 = vmul.f32 %v1128, 1.442695
      %v1131 = vpow.pop %v1130
      %v1132 = vmul.f32 %v1129, 1.442695
      %v1133 = vpow.pop %v1132
      %v1134 = vsel %vm721, %v1131, 0.0
      %1135 = vadd.xlane.f32.xlu0 %v1134
      %v1136 = vpop.xlane.xlu0 %1135
      %v1137 = vsel %vm721, %v1133, 0.0
      %1138 = vadd.xlane.f32.xlu0 %v1137
      %v1139 = vpop.xlane.xlu0 %1138
      %v1140 = vrcp.pop %v1136
      %v1141 = vrcp.pop %v1139
      %v1142 = vmul.f32 %v1131, %v1140
      %v1143 = vmul.f32 %v1133, %v1141
      %v1144 = vpack.c.bf16 %v1143, %v1142
      %1145 = vrot.lane.b32.xlu0 %v663, 40
      %v1146 = vpop.permute.xlu0 %1145
      %v1149 = vsel %vm721, %v1144, 0
      %1151 = vmatprep.subr.bf16.mxu0 0
      %1152 = vmatpush1.bf16.msra.mxu0 %v1146
      %1153 = vmatprep.subr.bf16.mxu0 0
      %1154 = vmatpush1.bf16.msra.mxu0 0
      %1155 = vmatprep.subr.bf16.mxu0 0
      %1156 = vmatpush1.bf16.msra.mxu0 0
      %1157 = vmatprep.subr.bf16.mxu0 0
      %1158 = vmatpush1.bf16.msra.mxu0 0
      %1159 = vmatprep.subr.bf16.mxu0 0
      %1160 = vmatpush1.bf16.msra.mxu0 0
      %1161 = vmatprep.subr.bf16.mxu0 0
      %1162 = vmatpush1.bf16.msra.mxu0 0
      %1163 = vmatprep.subr.bf16.mxu0 0
      %1164 = vmatpush1.bf16.msra.mxu0 0
      %1165 = vmatprep.subr.bf16.mxu0 0
      %1166 = vmatpush1.bf16.msra.mxu0 0
      %1167 = vmatprep.subr.bf16.mxu0 0
      %1168 = vmatpush1.bf16.msra.mxu0 0
      %1169 = vmatprep.subr.bf16.mxu0 0
      %1170 = vmatpush1.bf16.msra.mxu0 0
      %1171 = vmatprep.subr.bf16.mxu0 0
      %1172 = vmatpush1.bf16.msra.mxu0 0
      %1173 = vmatprep.subr.bf16.mxu0 0
      %1174 = vmatpush1.bf16.msra.mxu0 0
      %1175 = vmatprep.subr.bf16.mxu0 0
      %1176 = vmatpush1.bf16.msra.mxu0 0
      %1177 = vmatprep.subr.bf16.mxu0 0
      %1178 = vmatpush1.bf16.msra.mxu0 0
      %1179 = vmatprep.subr.bf16.mxu0 0
      %1180 = vmatpush1.bf16.msra.mxu0 0
      %1181 = vmatprep.subr.bf16.mxu0 0
      %1182 = vmatpush1.bf16.msra.mxu0 0
      %1183 = vmatprep.mubr.bf16.mxu0 0
      %1184 = vmatmul.mubr.bf16.gmra.mrb[0].mxu0 %v1149
      %v1185 = vpop.f32.mrb[0].mxu0
      %v1186 = vadd.f32 0.0, %v1185
      %v1187 = vpop.f32.mrb[0].mxu0
      %v1188 = vpop.f32.mrb[0].mxu0
      %v1189 = vadd.f32 0.0, %v1188
      %v1190 = vpop.f32.mrb[0].mxu0
      %1191 = vdwg.mxu0
      %1194 = vrot.lane.b32.xlu0 %v1186, 24
      %v1195 = vpop.permute.xlu0 %1194
      %1196 = vrot.lane.b32.xlu0 %v1189, 24
      %v1197 = vpop.permute.xlu0 %1196
      %vm1200 = vcmask 261312
      %1201 = vst.msk [vmem:[#allocation3] sm:$0xff] %vm1200, %v1195
      %1202 = vst.msk [vmem:[#allocation3 + $0x8] sm:$0xff] %vm1200, %v1197
      %v1203 = vld [vmem:[#allocation3] sm:$0xff]
      %v1204 = vld [vmem:[#allocation3 + $0x8] sm:$0xff]
      %v1205 = vpack.c.bf16 %v1204, %v1203
      %v1206 = vld [vmem:[%s500] sm:$0xf]
      %v1207 = vld [vmem:[%s500 + $0x4] sm:$0xf]
      %v1208 = vld [vmem:[%s500 + $0x8] sm:$0xf]
      %v1209 = vld [vmem:[%s500 + $0xc] sm:$0xf]
      %v1214 = vunpack.c.l.b16 %v1206
      %v1215 = vunpack.c.l.b16 %v1207
      %v1216 = vunpack.c.l.b16 %v1208
      %v1217 = vunpack.c.l.b16 %v1209
      %v1218 = vpack.c.b16 %v1215, %v1214
      %v1219 = vpack.c.b16 %v1217, %v1216
      %v1223 = vsel %vm528, %v1205, 0
      %1225 = vmatprep.subr.bf16.mxu0 0
      %1226 = vmatpush1.bf16.msra.mxu0 %v1218
      %1227 = vmatprep.subr.bf16.mxu0 0
      %1228 = vmatpush1.bf16.msra.mxu0 %v1219
      %1229 = vmatprep.subr.bf16.mxu0 0
      %1230 = vmatpush1.bf16.msra.mxu0 0
      %1231 = vmatprep.subr.bf16.mxu0 0
      %1232 = vmatpush1.bf16.msra.mxu0 0
      %1233 = vmatprep.subr.bf16.mxu0 0
      %1234 = vmatpush1.bf16.msra.mxu0 0
      %1235 = vmatprep.subr.bf16.mxu0 0
      %1236 = vmatpush1.bf16.msra.mxu0 0
      %1237 = vmatprep.subr.bf16.mxu0 0
      %1238 = vmatpush1.bf16.msra.mxu0 0
      %1239 = vmatprep.subr.bf16.mxu0 0
      %1240 = vmatpush1.bf16.msra.mxu0 0
      %1241 = vmatprep.subr.bf16.mxu0 0
      %1242 = vmatpush1.bf16.msra.mxu0 0
      %1243 = vmatprep.subr.bf16.mxu0 0
      %1244 = vmatpush1.bf16.msra.mxu0 0
      %1245 = vmatprep.subr.bf16.mxu0 0
      %1246 = vmatpush1.bf16.msra.mxu0 0
      %1247 = vmatprep.subr.bf16.mxu0 0
      %1248 = vmatpush1.bf16.msra.mxu0 0
      %1249 = vmatprep.subr.bf16.mxu0 0
      %1250 = vmatpush1.bf16.msra.mxu0 0
      %1251 = vmatprep.subr.bf16.mxu0 0
      %1252 = vmatpush1.bf16.msra.mxu0 0
      %1253 = vmatprep.subr.bf16.mxu0 0
      %1254 = vmatpush1.bf16.msra.mxu0 0
      %1255 = vmatprep.subr.bf16.mxu0 0
      %1256 = vmatpush1.bf16.msra.mxu0 0
      %1257 = vmatprep.mubr.bf16.mxu0 0
      %1258 = vmatmul.mubr.bf16.gmra.mrb[0].mxu0 %v1223
      %v1259 = vpop.f32.mrb[0].mxu0
      %v1260 = vadd.f32 0.0, %v1259
      %v1261 = vpop.f32.mrb[0].mxu0
      %v1262 = vpop.f32.mrb[0].mxu0
      %v1263 = vadd.f32 0.0, %v1262
      %v1264 = vpop.f32.mrb[0].mxu0
      %1265 = vdwg.mxu0
      %v1266 = vadd.f32 %v524, %v1260
      %v1267 = vadd.f32 %v525, %v1263
      %v1268 = vmul.f32 %v1266, %v1266
      %v1269 = vmul.f32 %v1267, %v1267
      %v1270 = vsel %vm528, %v1268, 0.0
      %1271 = vadd.xlane.f32.xlu0 %v1270
      %v1272 = vpop.xlane.xlu0 %1271
      %v1273 = vsel %vm528, %v1269, 0.0
      %1274 = vadd.xlane.f32.xlu0 %v1273
      %v1275 = vpop.xlane.xlu0 %1274
      %v1276 = vmul.f32 %v1272, %v535
      %v1277 = vmul.f32 %v1275, %v535
      %v1278 = vadd.f32 %v1276, 1e-05
      %v1279 = vadd.f32 %v1277, 1e-05
      %v1280 = vrsqrt.pop %v1278
      %v1281 = vrsqrt.pop %v1279
      %v1282 = vmul.f32 %v1266, %v1280
      %v1283 = vmul.f32 %v1267, %v1281
      %v1284 = vld [vmem:[%s503] sm:$0x1]
      %v1286 = vlaneseq
      %v1287 = vshrl.u32 %v1286, 7
      %v1288 = vsub.s32 0, %v1287
      %v1289 = vrot.slane %v1284, %v1288
      %v1291 = vmul.f32 %v1282, %v1289
      %v1292 = vmul.f32 %v1283, %v1289
      %v1293 = vpack.c.bf16 %v1292, %v1291
      %v1294 = vld [vmem:[%s508] sm:$0xf]
      %v1295 = vld [vmem:[%s508 + $0x4] sm:$0xf]
      %v1296 = vld [vmem:[%s508 + $0x8] sm:$0xf]
      %v1297 = vld [vmem:[%s508 + $0xc] sm:$0xf]
      %v1302 = vunpack.c.l.b16 %v1294
      %v1303 = vunpack.c.l.b16 %v1295
      %v1304 = vunpack.c.l.b16 %v1296
      %v1305 = vunpack.c.l.b16 %v1297
      %v1306 = vpack.c.b16 %v1303, %v1302
      %v1307 = vpack.c.b16 %v1305, %v1304
      %v1311 = vsel %vm528, %v1293, 0
      %1313 = vmatprep.subr.bf16.mxu0 0
      %1314 = vmatpush1.bf16.msra.mxu0 %v1306
      %1315 = vmatprep.subr.bf16.mxu0 0
      %1316 = vmatpush1.bf16.msra.mxu0 %v1307
      %1317 = vmatprep.subr.bf16.mxu0 0
      %1318 = vmatpush1.bf16.msra.mxu0 0
      %1319 = vmatprep.subr.bf16.mxu0 0
      %1320 = vmatpush1.bf16.msra.mxu0 0
      %1321 = vmatprep.subr.bf16.mxu0 0
      %1322 = vmatpush1.bf16.msra.mxu0 0
      %1323 = vmatprep.subr.bf16.mxu0 0
      %1324 = vmatpush1.bf16.msra.mxu0 0
      %1325 = vmatprep.subr.bf16.mxu0 0
      %1326 = vmatpush1.bf16.msra.mxu0 0
      %1327 = vmatprep.subr.bf16.mxu0 0
      %1328 = vmatpush1.bf16.msra.mxu0 0
      %1329 = vmatprep.subr.bf16.mxu0 0
      %1330 = vmatpush1.bf16.msra.mxu0 0
      %1331 = vmatprep.subr.bf16.mxu0 0
      %1332 = vmatpush1.bf16.msra.mxu0 0
      %1333 = vmatprep.subr.bf16.mxu0 0
      %1334 = vmatpush1.bf16.msra.mxu0 0
      %1335 = vmatprep.subr.bf16.mxu0 0
      %1336 = vmatpush1.bf16.msra.mxu0 0
      %1337 = vmatprep.subr.bf16.mxu0 0
      %1338 = vmatpush1.bf16.msra.mxu0 0
      %1339 = vmatprep.subr.bf16.mxu0 0
      %1340 = vmatpush1.bf16.msra.mxu0 0
      %1341 = vmatprep.subr.bf16.mxu0 0
      %1342 = vmatpush1.bf16.msra.mxu0 0
      %1343 = vmatprep.subr.bf16.mxu0 0
      %1344 = vmatpush1.bf16.msra.mxu0 0
      %1345 = vmatprep.mubr.bf16.mxu0 0
      %1346 = vmatmul.mubr.bf16.gmra.mrb[0].mxu0 %v1311
      %v1347 = vpop.f32.mrb[0].mxu0
      %v1348 = vadd.f32 0.0, %v1347
      %v1349 = vpop.f32.mrb[0].mxu0
      %v1350 = vpop.f32.mrb[0].mxu0
      %v1351 = vadd.f32 0.0, %v1350
      %v1352 = vpop.f32.mrb[0].mxu0
      %1353 = vdwg.mxu0
      %v1354 = vxor.u32 %v1348, 2147483648
      %v1355 = vxor.u32 %v1351, 2147483648
      %v1356 = vmul.f32 %v1354, 1.442695
      %v1357 = vpow.pop %v1356
      %v1358 = vmul.f32 %v1355, 1.442695
      %v1359 = vpow.pop %v1358
      %v1360 = vadd.f32 %v1357, 1.0
      %v1361 = vadd.f32 %v1359, 1.0
      %v1362 = vrcp.pop %v1360
      %v1363 = vmul.f32 1.0, %v1362
      %v1364 = vrcp.pop %v1361
      %v1365 = vmul.f32 1.0, %v1364
      %v1366 = vmul.f32 %v1348, %v1363
      %v1367 = vmul.f32 %v1351, %v1365
      %1370 = vrot.lane.b32.xlu0 %v1348, 64
      %v1371 = vpop.permute.xlu0 %1370
      %1372 = vrot.lane.b32.xlu0 %v1351, 64
      %v1373 = vpop.permute.xlu0 %1372
      %v1376 = vmul.f32 %v1366, %v1371
      %v1377 = vmul.f32 %v1367, %v1373
      %v1378 = vpack.c.bf16 %v1377, %v1376
      %v1379 = vld [vmem:[%s513] sm:$0xf]
      %v1380 = vld [vmem:[%s513 + $0x4] sm:$0xf]
      %v1381 = vld [vmem:[%s513 + $0x8] sm:$0xf]
      %v1382 = vld [vmem:[%s513 + $0xc] sm:$0xf]
      %v1383 = vld [vmem:[%s513 + $0x10] sm:$0xf]
      %v1384 = vld [vmem:[%s513 + $0x14] sm:$0xf]
      %v1385 = vld [vmem:[%s513 + $0x18] sm:$0xf]
      %v1386 = vld [vmem:[%s513 + $0x1c] sm:$0xf]
      %v1395 = vunpack.c.l.b16 %v1379
      %v1396 = vunpack.c.l.b16 %v1380
      %v1397 = vunpack.c.l.b16 %v1381
      %v1398 = vunpack.c.l.b16 %v1382
      %v1399 = vunpack.c.l.b16 %v1383
      %v1400 = vunpack.c.l.b16 %v1384
      %v1401 = vunpack.c.l.b16 %v1385
      %v1402 = vunpack.c.l.b16 %v1386
      %v1403 = vpack.c.b16 %v1396, %v1395
      %v1404 = vpack.c.b16 %v1398, %v1397
      %v1405 = vpack.c.b16 %v1400, %v1399
      %v1406 = vpack.c.b16 %v1402, %v1401
      %vm1411 = vcmask 523264
      %v1413 = vsel %vm1411, %v1378, 0
      %1415 = vmatprep.subr.bf16.mxu0 0
      %1416 = vmatpush1.bf16.msra.mxu0 %v1403
      %1417 = vmatprep.subr.bf16.mxu0 0
      %1418 = vmatpush1.bf16.msra.mxu0 %v1404
      %1419 = vmatprep.subr.bf16.mxu0 0
      %1420 = vmatpush1.bf16.msra.mxu0 %v1405
      %1421 = vmatprep.subr.bf16.mxu0 0
      %1422 = vmatpush1.bf16.msra.mxu0 %v1406
      %1423 = vmatprep.subr.bf16.mxu0 0
      %1424 = vmatpush1.bf16.msra.mxu0 0
      %1425 = vmatprep.subr.bf16.mxu0 0
      %1426 = vmatpush1.bf16.msra.mxu0 0
      %1427 = vmatprep.subr.bf16.mxu0 0
      %1428 = vmatpush1.bf16.msra.mxu0 0
      %1429 = vmatprep.subr.bf16.mxu0 0
      %1430 = vmatpush1.bf16.msra.mxu0 0
      %1431 = vmatprep.subr.bf16.mxu0 0
      %1432 = vmatpush1.bf16.msra.mxu0 0
      %1433 = vmatprep.subr.bf16.mxu0 0
      %1434 = vmatpush1.bf16.msra.mxu0 0
      %1435 = vmatprep.subr.bf16.mxu0 0
      %1436 = vmatpush1.bf16.msra.mxu0 0
      %1437 = vmatprep.subr.bf16.mxu0 0
      %1438 = vmatpush1.bf16.msra.mxu0 0
      %1439 = vmatprep.subr.bf16.mxu0 0
      %1440 = vmatpush1.bf16.msra.mxu0 0
      %1441 = vmatprep.subr.bf16.mxu0 0
      %1442 = vmatpush1.bf16.msra.mxu0 0
      %1443 = vmatprep.subr.bf16.mxu0 0
      %1444 = vmatpush1.bf16.msra.mxu0 0
      %1445 = vmatprep.subr.bf16.mxu0 0
      %1446 = vmatpush1.bf16.msra.mxu0 0
      %1447 = vmatprep.mubr.bf16.mxu0 0
      %1448 = vmatmul.mubr.bf16.gmra.mrb[0].mxu0 %v1413
      %v1449 = vpop.f32.mrb[0].mxu0
      %v1450 = vadd.f32 0.0, %v1449
      %v1451 = vpop.f32.mrb[0].mxu0
      %v1452 = vpop.f32.mrb[0].mxu0
      %v1453 = vadd.f32 0.0, %v1452
      %v1454 = vpop.f32.mrb[0].mxu0
      %1455 = vdwg.mxu0
      %v1456 = vadd.f32 %v1266, %v1450
      %v1457 = vadd.f32 %v1267, %v1453
      %1458 = vst.msk [vmem:[#allocation2] sm:$0xff] %vm528, %v1456
      %1459 = vst.msk [vmem:[#allocation2 + $0x8] sm:$0xff] %vm528, %v1457
      %p1460 = scmp.eq.s32.totalorder %s24, 1
      // Predicated region
      $region77: #{transformer_forward.1} parent=71 // pred_check
        %p1461 = pneg %p1460
      $region78: #{transformer_forward.1} parent=71 // pred_check_branch
        %1463 = sbr.rel (%p1461) target = $region80
      $region79: #{transformer_forward.1} parent=71 // pred_region
        %v1464 = vmul.f32 %v1456, %v1456
        %v1465 = vmul.f32 %v1457, %v1457
        %v1466 = vsel %vm528, %v1464, 0.0
        %1467 = vadd.xlane.f32.xlu0 %v1466
        %v1468 = vpop.xlane.xlu0 %1467
        %v1469 = vsel %vm528, %v1465, 0.0
        %1470 = vadd.xlane.f32.xlu0 %v1469
        %v1471 = vpop.xlane.xlu0 %1470
        %v1472 = vmul.f32 %v1468, %v535
        %v1473 = vmul.f32 %v1471, %v535
        %v1474 = vadd.f32 %v1472, 1e-05
        %v1475 = vadd.f32 %v1473, 1e-05
        %v1476 = vrsqrt.pop %v1474
        %v1477 = vrsqrt.pop %v1475
        %v1478 = vmul.f32 %v1456, %v1476
        %v1479 = vmul.f32 %v1457, %v1477
        %v1480 = vld [vmem:[%s11] sm:$0x1]
        %v1482 = vlaneseq
        %v1483 = vshrl.u32 %v1482, 7
        %v1484 = vsub.s32 0, %v1483
        %v1485 = vrot.slane %v1480, %v1484
        %v1487 = vmul.f32 %v1478, %v1485
        %v1488 = vmul.f32 %v1479, %v1485
        %v1489 = vpack.c.bf16 %v1488, %v1487
        %v1490 = vld [vmem:[%s12] sm:$0xf]
        %v1491 = vld [vmem:[%s12 + $0x4] sm:$0xf]
        %v1492 = vld [vmem:[%s12 + $0x8] sm:$0xf]
        %v1493 = vld [vmem:[%s12 + $0xc] sm:$0xf]
        %v1498 = vunpack.c.l.b16 %v1490
        %v1499 = vunpack.c.l.b16 %v1491
        %v1500 = vunpack.c.l.b16 %v1492
        %v1501 = vunpack.c.l.b16 %v1493
        %v1502 = vpack.c.b16 %v1499, %v1498
        %v1503 = vpack.c.b16 %v1501, %v1500
        %v1507 = vsel %vm528, %v1489, 0
        %1509 = vmatprep.subr.bf16.mxu0 0
        %1510 = vmatpush1.bf16.msra.mxu0 %v1502
        %1511 = vmatprep.subr.bf16.mxu0 0
        %1512 = vmatpush1.bf16.msra.mxu0 %v1503
        %1513 = vmatprep.subr.bf16.mxu0 0
        %1514 = vmatpush1.bf16.msra.mxu0 0
        %1515 = vmatprep.subr.bf16.mxu0 0
        %1516 = vmatpush1.bf16.msra.mxu0 0
        %1517 = vmatprep.subr.bf16.mxu0 0
        %1518 = vmatpush1.bf16.msra.mxu0 0
        %1519 = vmatprep.subr.bf16.mxu0 0
        %1520 = vmatpush1.bf16.msra.mxu0 0
        %1521 = vmatprep.subr.bf16.mxu0 0
        %1522 = vmatpush1.bf16.msra.mxu0 0
        %1523 = vmatprep.subr.bf16.mxu0 0
        %1524 = vmatpush1.bf16.msra.mxu0 0
        %1525 = vmatprep.subr.bf16.mxu0 0
        %1526 = vmatpush1.bf16.msra.mxu0 0
        %1527 = vmatprep.subr.bf16.mxu0 0
        %1528 = vmatpush1.bf16.msra.mxu0 0
        %1529 = vmatprep.subr.bf16.mxu0 0
        %1530 = vmatpush1.bf16.msra.mxu0 0
        %1531 = vmatprep.subr.bf16.mxu0 0
        %1532 = vmatpush1.bf16.msra.mxu0 0
        %1533 = vmatprep.subr.bf16.mxu0 0
        %1534 = vmatpush1.bf16.msra.mxu0 0
        %1535 = vmatprep.subr.bf16.mxu0 0
        %1536 = vmatpush1.bf16.msra.mxu0 0
        %1537 = vmatprep.subr.bf16.mxu0 0
        %1538 = vmatpush1.bf16.msra.mxu0 0
        %1539 = vmatprep.subr.bf16.mxu0 0
        %1540 = vmatpush1.bf16.msra.mxu0 0
        %1541 = vmatprep.mubr.bf16.mxu0 0
        %1542 = vmatmul.mubr.bf16.gmra.mrb[0].mxu0 %v1507
        %v1543 = vpop.f32.mrb[0].mxu0
        %v1544 = vadd.f32 0.0, %v1543
        %v1545 = vpop.f32.mrb[0].mxu0
        %v1546 = vpop.f32.mrb[0].mxu0
        %v1547 = vadd.f32 0.0, %v1546
        %v1548 = vpop.f32.mrb[0].mxu0
        %1549 = vdwg.mxu0
        %1550 = vst.msk [vmem:[%s13] sm:$0xff] %vm1411, %v1544
        %1551 = vst.msk [vmem:[%s13 + $0x8] sm:$0xff] %vm1411, %v1547
      $region80: #{transformer_forward.1} parent=71 // pred_fallthru
        _
      // Predicated region
      $region81: #{transformer_forward.1} parent=71 // pred_check
        %p1552 = pneg %p340
      $region82: #{transformer_forward.1} parent=71 // pred_check_branch
        %1554 = sbr.rel (%p1552) target = $region84
      $region83: #{transformer_forward.1} parent=71 // pred_region
        _
      $region84: #{transformer_forward.1} parent=71 // pred_fallthru
        _
      // Predicated region
      $region85: #{transformer_forward.1} parent=71 // pred_check
        %p1555 = pneg %p340
      $region86: #{transformer_forward.1} parent=71 // pred_check_branch
        %1557 = sbr.rel (%p1555) target = $region88
      $region87: #{transformer_forward.1} parent=71 // pred_region
        _
      $region88: #{transformer_forward.1} parent=71 // pred_fallthru
        _
    $region72: #{transformer_forward.1} parent=5 // pred_fallthru
      _
    %p1558 = scmp.le.s32.totalorder 2, %s19
    // Predicated region
    $region89: #{transformer_forward.1} parent=5 // pred_check
      %p1559 = pneg %p1558
    $region90: #{transformer_forward.1} parent=5 // pred_check_branch
      %1561 = sbr.rel (%p1559) target = $region92
    $region91: #{transformer_forward.1} parent=5 // pred_region
      %s1562 = ssub.s32 %s19, 2
    $region92: #{transformer_forward.1} parent=5 // pred_fallthru
      _
  $region6: #{transformer_forward.1} parent=0 // loop_footer
    %s23 = sadd.s32 1, %s19
  $region7: #{transformer_forward.1} parent=0 // loop_footer_branch
    %18 = sbr.rel target = $region3
  $region8: #{transformer_forward.1} parent=0 // loop_exit
    _

</llo_original>
